<compile_context>
chip_gen: v7x
topology: tpu7x:2x2x1
jax: 0.10.0
libtpu: 0.0.40
codegen_flags: <defaults>
</compile_context>

<pallas_src>
import math
import functools

import jax
import jax.numpy as jnp
from jax import lax
from jax.experimental import pallas as pl
from jax.experimental.pallas import tpu as pltpu

# ---- model hyper-parameters (small, consistent with the module) -------------
B = 2          # batch
S = 8          # sequence length
D_MODEL = 32   # d_model
NUM_HEADS = 4
D_K = D_MODEL // NUM_HEADS
D_FF = 64      # dim_feedforward

# ---- packed weight-slab layout (all row offsets are multiples of 8) ---------
LANES = 128
WQKV_OFF, WQKV_ROWS = 0, 128      # rows   0..127 : [Wq/sqrt(dk) | Wk | Wv] (in-dim padded)
BQKV_OFF = 128                    # rows 128..135 : [bq/sqrt(dk) | bk | bv] in row 128
WO_OFF, WO_ROWS = 136, 32         # rows 136..167 : Wo (rows h*8..h*8+8 = head h)
BO_OFF = 168                      # rows 168..175 : bo in row 168
W1_OFF, W1_ROWS = 176, 128        # rows 176..303 : W1 (in-dim padded to 128)
B1_OFF = 304                      # rows 304..311 : b1 in row 304
W2_OFF, W2_ROWS = 312, 128        # rows 312..439 : W2 (in-dim padded to 128)
B2_OFF = 440                      # rows 440..447 : b2 in row 440
SLAB_ROWS = 448


def pack_weights(params):
    """Pack all weights/biases into one (448, 128) f32 slab (single DMA)."""
    (wq, bq, wk, bk, wv, bv, wo, bo, w1, b1, w2, b2) = params
    inv_sqrt_dk = 1.0 / math.sqrt(D_K)

    def slot(a, rows):
        return jnp.pad(a, ((0, rows - a.shape[0]), (0, LANES - a.shape[1])))

    wqkv = jnp.concatenate([wq * inv_sqrt_dk, wk, wv], axis=1)   # (32, 96)
    bqkv = jnp.concatenate([bq * inv_sqrt_dk, bk, bv], axis=1)   # (1, 96)

    slab = jnp.concatenate([
        slot(wqkv, WQKV_ROWS),
        slot(bqkv, 8),
        slot(wo, WO_ROWS),
        slot(bo, 8),
        slot(w1, W1_ROWS),
        slot(b1, 8),
        slot(w2, W2_ROWS),
        slot(b2, 8),
    ], axis=0)
    assert slab.shape == (SLAB_ROWS, LANES)
    return slab.astype(jnp.float32)


def encoder_layer_kernel(x_ref, w_ref, o_ref, *, num_heads, d_k):
    """One batch element per grid step; everything resident in VMEM.

    x_ref: (S, 128)   activations for this batch element (cols >= d_model are 0)
    w_ref: (448, 128) packed weight slab (layout above)
    o_ref: (S, 128)
    """
    d_model = num_heads * d_k
    x = x_ref[...]                                             # (S, 128)

    # --- fused Q/K/V projection (1/sqrt(d_k) pre-folded into Wq/bq) ---
    qkv = jnp.dot(x, w_ref[WQKV_OFF:WQKV_OFF + WQKV_ROWS, :],
                  preferred_element_type=jnp.float32)
    qkv = qkv + w_ref[BQKV_OFF:BQKV_OFF + 1, :]                # (S, 128): [q | k | v | 0]

    # --- attention: accumulate each head's out-projection into the residual ---
    acc = x + w_ref[BO_OFF:BO_OFF + 1, :]                      # residual 1 + out-proj bias
    contract_last = (((1,), (1,)), ((), ()))                   # q @ k^T without a transpose
    for h in range(num_heads):                                 # static 4-iteration loop
        qh = qkv[:, h * d_k:(h + 1) * d_k]                     # pre-scaled q
        kh = qkv[:, d_model + h * d_k: d_model + (h + 1) * d_k]
        vh = qkv[:, 2 * d_model + h * d_k: 2 * d_model + (h + 1) * d_k]

        s = lax.dot_general(qh, kh, contract_last,
                            preferred_element_type=jnp.float32)        # (S, S)
        s = s - jnp.max(s, axis=-1, keepdims=True)
        p = jnp.exp(s)
        p = p * pl.reciprocal(jnp.sum(p, axis=-1, keepdims=True), approx=True)
        hv = jnp.dot(p, vh, preferred_element_type=jnp.float32)        # (S, d_k)
        # Wo row-slice: multiple-of-8 sublane slice, free for f32; replaces the
        # head concat + separate (S,32)@(32,32) out-projection matmul.
        wo_h = w_ref[WO_OFF + h * d_k: WO_OFF + (h + 1) * d_k, :]       # (d_k, 128)
        acc = acc + jnp.dot(hv, wo_h, preferred_element_type=jnp.float32)

    x1 = acc                                                   # residual 1 (dropout p=0)

    # --- feed-forward ---
    hdn = jnp.dot(x1, w_ref[W1_OFF:W1_OFF + W1_ROWS, :],
                  preferred_element_type=jnp.float32) + w_ref[B1_OFF:B1_OFF + 1, :]
    hdn = jnp.maximum(hdn, 0.0)                                # ReLU
    ff = jnp.dot(hdn, w_ref[W2_OFF:W2_OFF + W2_ROWS, :],
                 preferred_element_type=jnp.float32) + w_ref[B2_OFF:B2_OFF + 1, :]

    # residual 2 (dropout p=0 -> identity); lane-dense unmasked store
    o_ref[...] = (x1 + ff).astype(o_ref.dtype)


def transformer_encoder_layer(x, params):
    """x: (B, S, D_MODEL) float32 -> (B, S, D_MODEL) float32."""
    Bsz, Ssz, Dsz = x.shape
    w_slab = pack_weights(params)                              # (448, 128), one operand

    # fold batch into rows and zero-pad to 128 lanes (lane-dense loads/stores)
    x2 = jnp.pad(x.reshape(Bsz * Ssz, Dsz), ((0, 0), (0, LANES - Dsz)))

    kernel = functools.partial(encoder_layer_kernel, num_heads=NUM_HEADS, d_k=D_K)

    out = pl.pallas_call(
        kernel,
        out_shape=jax.ShapeDtypeStruct((Bsz * Ssz, LANES), x.dtype),
        grid=(Bsz,),
        in_specs=[pl.BlockSpec((Ssz, LANES), lambda b: (b, 0)),          # per-batch rows
                  pl.BlockSpec((SLAB_ROWS, LANES), lambda b: (0, 0))],   # weights: const idx
        out_specs=pl.BlockSpec((Ssz, LANES), lambda b: (b, 0)),
        compiler_params=pltpu.CompilerParams(
            dimension_semantics=("parallel",)),                # shard batch over v7x TCs
    )(x2, w_slab)

    return out[:, :Dsz].reshape(Bsz, Ssz, Dsz)


def make_params(key):
    """Deterministic synthetic parameters (weights stored as [in, out])."""
    keys = jax.random.split(key, 12)
    scale = 0.1

    def w(k, shape):
        return (scale * jax.random.normal(k, shape)).astype(jnp.float32)

    wq = w(keys[0], (D_MODEL, D_MODEL)); bq = w(keys[1], (1, D_MODEL))
    wk = w(keys[2], (D_MODEL, D_MODEL)); bk = w(keys[3], (1, D_MODEL))
    wv = w(keys[4], (D_MODEL, D_MODEL)); bv = w(keys[5], (1, D_MODEL))
    wo = w(keys[6], (D_MODEL, D_MODEL)); bo = w(keys[7], (1, D_MODEL))
    w1 = w(keys[8], (D_MODEL, D_FF));    b1 = w(keys[9], (1, D_FF))
    w2 = w(keys[10], (D_FF, D_MODEL));   b2 = w(keys[11], (1, D_MODEL))
    return (wq, bq, wk, bk, wv, bv, wo, bo, w1, b1, w2, b2)


def reference_forward(x, params):
    """Pure-JAX replica of the PyTorch forward (for verification)."""
    (wq, bq, wk, bk, wv, bv, wo, bo, w1, b1, w2, b2) = params
    Bsz, Ssz, Dsz = x.shape

    def heads(t):  # (B, S, D) -> (B, H, S, d_k)
        return t.reshape(Bsz, Ssz, NUM_HEADS, D_K).transpose(0, 2, 1, 3)

    q = heads(x @ wq + bq)
    k = heads(x @ wk + bk)
    v = heads(x @ wv + bv)

    scores = jnp.einsum("bhqd,bhkd->bhqk", q, k) / math.sqrt(D_K)
    scores = scores - jnp.max(scores, axis=-1, keepdims=True)
    p = jax.nn.softmax(scores, axis=-1)
    attn = jnp.einsum("bhqk,bhkd->bhqd", p, v)
    attn = attn.transpose(0, 2, 1, 3).reshape(Bsz, Ssz, Dsz)
    attn = attn @ wo + bo

    x1 = x + attn
    ff = jnp.maximum(x1 @ w1 + b1, 0.0) @ w2 + b2
    return x1 + ff


if __name__ == "__main__":
    key = jax.random.PRNGKey(0)
    kx, kp = jax.random.split(key)

    x = jax.random.normal(kx, (B, S, D_MODEL), dtype=jnp.float32)
    params = make_params(kp)

    out = transformer_encoder_layer(x, params)
    out = jax.block_until_ready(out)

    ref = reference_forward(x, params)
    assert out.shape == (B, S, D_MODEL)
    # tolerance slightly relaxed vs exact-f32 because the softmax denominator
    # uses the EUP approximate reciprocal
    assert jnp.allclose(out, ref, atol=1e-3, rtol=1e-3), "mismatch vs reference"

    print("KERNEL_OK")
</pallas_src>

<mosaic_0001>
module attributes {stable_mosaic.version = 11 : i64} {
  func.func @encoder_layer_kernel(%arg0: i32, %arg1: memref<8x128xf32, #tpu.memory_space<vmem>>, %arg2: memref<448x128xf32, #tpu.memory_space<vmem>>, %arg3: memref<8x128xf32, #tpu.memory_space<vmem>>) attributes {dimension_semantics = [#tpu.dimension_semantics<parallel>], iteration_bounds = array<i64: 2>, scalar_prefetch = 0 : i64, scratch_operands = 0 : i64, tpu.core_type = #tpu.core_type<tc>, window_params = [{transform_indices = @transform_0, window_bounds = array<i64: 8, 128>}, {pipeline_mode = #tpu.pipeline_mode<synchronous>, transform_indices = @transform_1, window_bounds = array<i64: 448, 128>}, {transform_indices = @transform_2, window_bounds = array<i64: 8, 128>}]} {
    %c0 = arith.constant 0 : index
    %c0_0 = arith.constant 0 : index
    %0 = vector.load %arg1[%c0, %c0_0] : memref<8x128xf32, #tpu.memory_space<vmem>>, vector<8x128xf32>
    %c0_1 = arith.constant 0 : index
    %c0_2 = arith.constant 0 : index
    %1 = vector.load %arg2[%c0_1, %c0_2] : memref<448x128xf32, #tpu.memory_space<vmem>>, vector<128x128xf32>
    %cst = arith.constant dense<0.000000e+00> : vector<8x128xf32>
    %2 = tpu.matmul %0, %1, %cst {dimension_numbers = #tpu.dot_dimension_numbers<[1], [0], [0], [1], [0, 0, 1, 1], [], []>} : vector<8x128xf32>, vector<128x128xf32>, vector<8x128xf32> -> vector<8x128xf32>
    %c128 = arith.constant 128 : index
    %c0_3 = arith.constant 0 : index
    %3 = vector.load %arg2[%c128, %c0_3] : memref<448x128xf32, #tpu.memory_space<vmem>>, vector<1x128xf32>
    %4 = vector.broadcast %3 : vector<1x128xf32> to vector<8x128xf32>
    %5 = arith.addf %2, %4 : vector<8x128xf32>
    %c168 = arith.constant 168 : index
    %c0_4 = arith.constant 0 : index
    %6 = vector.load %arg2[%c168, %c0_4] : memref<448x128xf32, #tpu.memory_space<vmem>>, vector<1x128xf32>
    %7 = vector.broadcast %6 : vector<1x128xf32> to vector<8x128xf32>
    %8 = arith.addf %0, %7 : vector<8x128xf32>
    %9 = vector.extract_strided_slice %5 {offsets = [0, 0], sizes = [8, 8], strides = [1, 1]} : vector<8x128xf32> to vector<8x8xf32>
    %10 = vector.extract_strided_slice %5 {offsets = [0, 32], sizes = [8, 8], strides = [1, 1]} : vector<8x128xf32> to vector<8x8xf32>
    %11 = vector.extract_strided_slice %5 {offsets = [0, 64], sizes = [8, 8], strides = [1, 1]} : vector<8x128xf32> to vector<8x8xf32>
    %cst_5 = arith.constant dense<0.000000e+00> : vector<8x8xf32>
    %12 = tpu.matmul %9, %10, %cst_5 {dimension_numbers = #tpu.dot_dimension_numbers<[1], [1], [0], [0], [0, 0, 1, 0], [], []>} : vector<8x8xf32>, vector<8x8xf32>, vector<8x8xf32> -> vector<8x8xf32>
    %cst_6 = arith.constant dense<0xFF800000> : vector<8xf32>
    %13 = vector.multi_reduction <maximumf>, %12, %cst_6 [1] : vector<8x8xf32> to vector<8xf32>
    %14 = vector.shape_cast %13 : vector<8xf32> to vector<8x1xf32>
    %15 = vector.broadcast %14 : vector<8x1xf32> to vector<8x8xf32>
    %16 = arith.subf %12, %15 : vector<8x8xf32>
    %17 = math.exp %16 : vector<8x8xf32>
    %cst_7 = arith.constant dense<0.000000e+00> : vector<8xf32>
    %18 = vector.multi_reduction <add>, %17, %cst_7 [1] : vector<8x8xf32> to vector<8xf32>
    %19 = vector.shape_cast %18 : vector<8xf32> to vector<8x1xf32>
    %20 = tpu.reciprocal %19 {approx = true} : vector<8x1xf32> -> vector<8x1xf32>
    %21 = vector.broadcast %20 : vector<8x1xf32> to vector<8x8xf32>
    %22 = arith.mulf %17, %21 : vector<8x8xf32>
    %cst_8 = arith.constant dense<0.000000e+00> : vector<8x8xf32>
    %23 = tpu.matmul %22, %11, %cst_8 {dimension_numbers = #tpu.dot_dimension_numbers<[1], [0], [0], [1], [0, 0, 1, 1], [], []>} : vector<8x8xf32>, vector<8x8xf32>, vector<8x8xf32> -> vector<8x8xf32>
    %c136 = arith.constant 136 : index
    %c0_9 = arith.constant 0 : index
    %24 = vector.load %arg2[%c136, %c0_9] : memref<448x128xf32, #tpu.memory_space<vmem>>, vector<8x128xf32>
    %cst_10 = arith.constant dense<0.000000e+00> : vector<8x128xf32>
    %25 = tpu.matmul %23, %24, %cst_10 {dimension_numbers = #tpu.dot_dimension_numbers<[1], [0], [0], [1], [0, 0, 1, 1], [], []>} : vector<8x8xf32>, vector<8x128xf32>, vector<8x128xf32> -> vector<8x128xf32>
    %26 = arith.addf %8, %25 : vector<8x128xf32>
    %27 = vector.extract_strided_slice %5 {offsets = [0, 8], sizes = [8, 8], strides = [1, 1]} : vector<8x128xf32> to vector<8x8xf32>
    %28 = vector.extract_strided_slice %5 {offsets = [0, 40], sizes = [8, 8], strides = [1, 1]} : vector<8x128xf32> to vector<8x8xf32>
    %29 = vector.extract_strided_slice %5 {offsets = [0, 72], sizes = [8, 8], strides = [1, 1]} : vector<8x128xf32> to vector<8x8xf32>
    %cst_11 = arith.constant dense<0.000000e+00> : vector<8x8xf32>
    %30 = tpu.matmul %27, %28, %cst_11 {dimension_numbers = #tpu.dot_dimension_numbers<[1], [1], [0], [0], [0, 0, 1, 0], [], []>} : vector<8x8xf32>, vector<8x8xf32>, vector<8x8xf32> -> vector<8x8xf32>
    %cst_12 = arith.constant dense<0xFF800000> : vector<8xf32>
    %31 = vector.multi_reduction <maximumf>, %30, %cst_12 [1] : vector<8x8xf32> to vector<8xf32>
    %32 = vector.shape_cast %31 : vector<8xf32> to vector<8x1xf32>
    %33 = vector.broadcast %32 : vector<8x1xf32> to vector<8x8xf32>
    %34 = arith.subf %30, %33 : vector<8x8xf32>
    %35 = math.exp %34 : vector<8x8xf32>
    %cst_13 = arith.constant dense<0.000000e+00> : vector<8xf32>
    %36 = vector.multi_reduction <add>, %35, %cst_13 [1] : vector<8x8xf32> to vector<8xf32>
    %37 = vector.shape_cast %36 : vector<8xf32> to vector<8x1xf32>
    %38 = tpu.reciprocal %37 {approx = true} : vector<8x1xf32> -> vector<8x1xf32>
    %39 = vector.broadcast %38 : vector<8x1xf32> to vector<8x8xf32>
    %40 = arith.mulf %35, %39 : vector<8x8xf32>
    %cst_14 = arith.constant dense<0.000000e+00> : vector<8x8xf32>
    %41 = tpu.matmul %40, %29, %cst_14 {dimension_numbers = #tpu.dot_dimension_numbers<[1], [0], [0], [1], [0, 0, 1, 1], [], []>} : vector<8x8xf32>, vector<8x8xf32>, vector<8x8xf32> -> vector<8x8xf32>
    %c144 = arith.constant 144 : index
    %c0_15 = arith.constant 0 : index
    %42 = vector.load %arg2[%c144, %c0_15] : memref<448x128xf32, #tpu.memory_space<vmem>>, vector<8x128xf32>
    %cst_16 = arith.constant dense<0.000000e+00> : vector<8x128xf32>
    %43 = tpu.matmul %41, %42, %cst_16 {dimension_numbers = #tpu.dot_dimension_numbers<[1], [0], [0], [1], [0, 0, 1, 1], [], []>} : vector<8x8xf32>, vector<8x128xf32>, vector<8x128xf32> -> vector<8x128xf32>
    %44 = arith.addf %26, %43 : vector<8x128xf32>
    %45 = vector.extract_strided_slice %5 {offsets = [0, 16], sizes = [8, 8], strides = [1, 1]} : vector<8x128xf32> to vector<8x8xf32>
    %46 = vector.extract_strided_slice %5 {offsets = [0, 48], sizes = [8, 8], strides = [1, 1]} : vector<8x128xf32> to vector<8x8xf32>
    %47 = vector.extract_strided_slice %5 {offsets = [0, 80], sizes = [8, 8], strides = [1, 1]} : vector<8x128xf32> to vector<8x8xf32>
    %cst_17 = arith.constant dense<0.000000e+00> : vector<8x8xf32>
    %48 = tpu.matmul %45, %46, %cst_17 {dimension_numbers = #tpu.dot_dimension_numbers<[1], [1], [0], [0], [0, 0, 1, 0], [], []>} : vector<8x8xf32>, vector<8x8xf32>, vector<8x8xf32> -> vector<8x8xf32>
    %cst_18 = arith.constant dense<0xFF800000> : vector<8xf32>
    %49 = vector.multi_reduction <maximumf>, %48, %cst_18 [1] : vector<8x8xf32> to vector<8xf32>
    %50 = vector.shape_cast %49 : vector<8xf32> to vector<8x1xf32>
    %51 = vector.broadcast %50 : vector<8x1xf32> to vector<8x8xf32>
    %52 = arith.subf %48, %51 : vector<8x8xf32>
    %53 = math.exp %52 : vector<8x8xf32>
    %cst_19 = arith.constant dense<0.000000e+00> : vector<8xf32>
    %54 = vector.multi_reduction <add>, %53, %cst_19 [1] : vector<8x8xf32> to vector<8xf32>
    %55 = vector.shape_cast %54 : vector<8xf32> to vector<8x1xf32>
    %56 = tpu.reciprocal %55 {approx = true} : vector<8x1xf32> -> vector<8x1xf32>
    %57 = vector.broadcast %56 : vector<8x1xf32> to vector<8x8xf32>
    %58 = arith.mulf %53, %57 : vector<8x8xf32>
    %cst_20 = arith.constant dense<0.000000e+00> : vector<8x8xf32>
    %59 = tpu.matmul %58, %47, %cst_20 {dimension_numbers = #tpu.dot_dimension_numbers<[1], [0], [0], [1], [0, 0, 1, 1], [], []>} : vector<8x8xf32>, vector<8x8xf32>, vector<8x8xf32> -> vector<8x8xf32>
    %c152 = arith.constant 152 : index
    %c0_21 = arith.constant 0 : index
    %60 = vector.load %arg2[%c152, %c0_21] : memref<448x128xf32, #tpu.memory_space<vmem>>, vector<8x128xf32>
    %cst_22 = arith.constant dense<0.000000e+00> : vector<8x128xf32>
    %61 = tpu.matmul %59, %60, %cst_22 {dimension_numbers = #tpu.dot_dimension_numbers<[1], [0], [0], [1], [0, 0, 1, 1], [], []>} : vector<8x8xf32>, vector<8x128xf32>, vector<8x128xf32> -> vector<8x128xf32>
    %62 = arith.addf %44, %61 : vector<8x128xf32>
    %63 = vector.extract_strided_slice %5 {offsets = [0, 24], sizes = [8, 8], strides = [1, 1]} : vector<8x128xf32> to vector<8x8xf32>
    %64 = vector.extract_strided_slice %5 {offsets = [0, 56], sizes = [8, 8], strides = [1, 1]} : vector<8x128xf32> to vector<8x8xf32>
    %65 = vector.extract_strided_slice %5 {offsets = [0, 88], sizes = [8, 8], strides = [1, 1]} : vector<8x128xf32> to vector<8x8xf32>
    %cst_23 = arith.constant dense<0.000000e+00> : vector<8x8xf32>
    %66 = tpu.matmul %63, %64, %cst_23 {dimension_numbers = #tpu.dot_dimension_numbers<[1], [1], [0], [0], [0, 0, 1, 0], [], []>} : vector<8x8xf32>, vector<8x8xf32>, vector<8x8xf32> -> vector<8x8xf32>
    %cst_24 = arith.constant dense<0xFF800000> : vector<8xf32>
    %67 = vector.multi_reduction <maximumf>, %66, %cst_24 [1] : vector<8x8xf32> to vector<8xf32>
    %68 = vector.shape_cast %67 : vector<8xf32> to vector<8x1xf32>
    %69 = vector.broadcast %68 : vector<8x1xf32> to vector<8x8xf32>
    %70 = arith.subf %66, %69 : vector<8x8xf32>
    %71 = math.exp %70 : vector<8x8xf32>
    %cst_25 = arith.constant dense<0.000000e+00> : vector<8xf32>
    %72 = vector.multi_reduction <add>, %71, %cst_25 [1] : vector<8x8xf32> to vector<8xf32>
    %73 = vector.shape_cast %72 : vector<8xf32> to vector<8x1xf32>
    %74 = tpu.reciprocal %73 {approx = true} : vector<8x1xf32> -> vector<8x1xf32>
    %75 = vector.broadcast %74 : vector<8x1xf32> to vector<8x8xf32>
    %76 = arith.mulf %71, %75 : vector<8x8xf32>
    %cst_26 = arith.constant dense<0.000000e+00> : vector<8x8xf32>
    %77 = tpu.matmul %76, %65, %cst_26 {dimension_numbers = #tpu.dot_dimension_numbers<[1], [0], [0], [1], [0, 0, 1, 1], [], []>} : vector<8x8xf32>, vector<8x8xf32>, vector<8x8xf32> -> vector<8x8xf32>
    %c160 = arith.constant 160 : index
    %c0_27 = arith.constant 0 : index
    %78 = vector.load %arg2[%c160, %c0_27] : memref<448x128xf32, #tpu.memory_space<vmem>>, vector<8x128xf32>
    %cst_28 = arith.constant dense<0.000000e+00> : vector<8x128xf32>
    %79 = tpu.matmul %77, %78, %cst_28 {dimension_numbers = #tpu.dot_dimension_numbers<[1], [0], [0], [1], [0, 0, 1, 1], [], []>} : vector<8x8xf32>, vector<8x128xf32>, vector<8x128xf32> -> vector<8x128xf32>
    %80 = arith.addf %62, %79 : vector<8x128xf32>
    %c176 = arith.constant 176 : index
    %c0_29 = arith.constant 0 : index
    %81 = vector.load %arg2[%c176, %c0_29] : memref<448x128xf32, #tpu.memory_space<vmem>>, vector<128x128xf32>
    %cst_30 = arith.constant dense<0.000000e+00> : vector<8x128xf32>
    %82 = tpu.matmul %80, %81, %cst_30 {dimension_numbers = #tpu.dot_dimension_numbers<[1], [0], [0], [1], [0, 0, 1, 1], [], []>} : vector<8x128xf32>, vector<128x128xf32>, vector<8x128xf32> -> vector<8x128xf32>
    %c304 = arith.constant 304 : index
    %c0_31 = arith.constant 0 : index
    %83 = vector.load %arg2[%c304, %c0_31] : memref<448x128xf32, #tpu.memory_space<vmem>>, vector<1x128xf32>
    %84 = vector.broadcast %83 : vector<1x128xf32> to vector<8x128xf32>
    %85 = arith.addf %82, %84 : vector<8x128xf32>
    %cst_32 = arith.constant 0.000000e+00 : f32
    %86 = vector.broadcast %cst_32 : f32 to vector<8x128xf32>
    %87 = arith.maximumf %85, %86 : vector<8x128xf32>
    %c312 = arith.constant 312 : index
    %c0_33 = arith.constant 0 : index
    %88 = vector.load %arg2[%c312, %c0_33] : memref<448x128xf32, #tpu.memory_space<vmem>>, vector<128x128xf32>
    %cst_34 = arith.constant dense<0.000000e+00> : vector<8x128xf32>
    %89 = tpu.matmul %87, %88, %cst_34 {dimension_numbers = #tpu.dot_dimension_numbers<[1], [0], [0], [1], [0, 0, 1, 1], [], []>} : vector<8x128xf32>, vector<128x128xf32>, vector<8x128xf32> -> vector<8x128xf32>
    %c440 = arith.constant 440 : index
    %c0_35 = arith.constant 0 : index
    %90 = vector.load %arg2[%c440, %c0_35] : memref<448x128xf32, #tpu.memory_space<vmem>>, vector<1x128xf32>
    %91 = vector.broadcast %90 : vector<1x128xf32> to vector<8x128xf32>
    %92 = arith.addf %89, %91 : vector<8x128xf32>
    %93 = arith.addf %80, %92 : vector<8x128xf32>
    %c0_36 = arith.constant 0 : index
    %c0_37 = arith.constant 0 : index
    %94 = vector.load %arg3[%c0_36, %c0_37] : memref<8x128xf32, #tpu.memory_space<vmem>>, vector<8x128xf32>
    tpu.vector_store %arg3[%c0_36, %c0_37], %93 {strides = array<i32>} : memref<8x128xf32, #tpu.memory_space<vmem>>, vector<8x128xf32>,
    return
  }
  func.func @transform_0(%arg0: i32) -> (i32, i32) {
    %c0_i32 = arith.constant 0 : i32
    %c0_i32_0 = arith.constant 0 : i32
    return %arg0, %c0_i32 : i32, i32
  }
  func.func @transform_1(%arg0: i32) -> (i32, i32) {
    %c0_i32 = arith.constant 0 : i32
    %c0_i32_0 = arith.constant 0 : i32
    %c0_i32_1 = arith.constant 0 : i32
    return %c0_i32, %c0_i32_0 : i32, i32
  }
  func.func @transform_2(%arg0: i32) -> (i32, i32) {
    %c0_i32 = arith.constant 0 : i32
    %c0_i32_0 = arith.constant 0 : i32
    return %arg0, %c0_i32 : i32, i32
  }
}

</mosaic_0001>

<llo_original>
// kernel: tpu_custom_call.1
$region0: #{tpu_custom_call.1}
  #allocation0 [shape = 'u32[]', space=smem, size = 0x4, offset = 0x4, fixed_abs, tag = 'smem constant byte address 0x4 - core index']
  #allocation1 [shape = 'u32[144,128]{1,0:T(1,128)}', space=vmem, size = 0x12000, scoped, tag = 'internal scratch']
  %s0 = inlined_call_operand.hbm [shape: f32[16,128], index: 0, kind: input, shape index: {}]
  %s1 = inlined_call_operand.hbm [shape: f32[448,128], index: 1, kind: input, shape index: {}]
  %s2 = inlined_call_operand.hbm [shape: f32[16,128], index: 2, kind: output, shape index: {}]
  %s3 = sld [smem:[#allocation0]]
  $region49: #{tpu_custom_call.1} parent=0
    _
  %s5 = ssub.s32 1, %s3
  %s6 = scalar_select 0, %s5, %s3
  $region1: #{tpu_custom_call.1} parent=0
    #allocation2 [shape = 'u8[8192]{0}', space=vmem, size = 0x2000, scoped, tag = 'input window, operand 0']
    #allocation3 [shape = 's32[2]{0}', space=sflag, size = 0x8, scoped, tag = 'scoped memory for tpu_custom_call.1']
    #allocation4 [shape = 's32[2]{0}', space=sflag, size = 0x8, scoped, tag = 'scoped memory for tpu_custom_call.1']
    #allocation5 [shape = 'u8[229376]{0}', space=vmem, size = 0x38000, scoped, tag = 'input window, operand 1, single buffered']
    #allocation6 [shape = 's32[1]{0}', space=sflag, size = 0x4, scoped, tag = 'scoped memory for tpu_custom_call.1']
    #allocation7 [shape = 'u8[8192]{0}', space=vmem, size = 0x2000, scoped, tag = 'output window, operand 0']
    %7 = vsyncpa [#allocation3], 0
    %s8 = scalar_lea.sflag [#allocation3], 1
    %9 = vsyncpa %s8, 0
    %10 = vsyncpa [#allocation6], 0
    %11 = vsyncpa [#allocation4], 0
    %s12 = scalar_lea.sflag [#allocation4], 1
    %13 = vsyncpa %s12, 0
    loop: start=0, step=1, limit=4
    $region2: #{tpu_custom_call.1} parent=1 // loop_pre_header
      _
    $region3: #{tpu_custom_call.1} parent=1 // loop_header
      %s15 = sphi 0, %s19
      %p16 = scmp.ge.s32.totalorder %s15, 4
      %s25 = sphi 0, %s27
      %s28 = sphi 0, %s25
      %s29 = sphi 0, %s28
      %s45 = sphi 0, %s29
      %s49 = sphi 0, %s49
      %s51 = sphi 0, %s49
      %s52 = sphi 0, %s51
      %s66 = sphi 0, %s52
      %s72 = sphi 0, %s74
      %s75 = sphi 0, %s72
      %s76 = sphi 0, %s75
      %s92 = sphi 0, %s76
    $region4: #{tpu_custom_call.1} parent=1 // loop_header_branch
      %18 = sbr.rel (%p16) target = $region8
    $region5: #{tpu_custom_call.1} parent=1 // loop_body
      %s20 = ssub.s32 %s15, 1
      %s21 = ssub.s32 %s15, 2
      %s22 = sadd.s32 %s15, 1
      %s23 = ssub.s32 %s15, %s22
      %p24 = scmp.eq.s32.totalorder %s23, 0
      %s26 = sadd.s32 %s25, 1
      %s27 = scalar_select %p24, %s25, %s26
      %p30 = pneg %p24
      %p31 = scmp.eq.s32.totalorder %s15, 1
      %p32 = por %p30, %p31
      %p33 = scmp.ne.s32.totalorder %s25, %s28
      %p34 = scmp.eq.s32.totalorder %s15, 0
      %p35 = por %p33, %p34
      %p36 = scmp.ne.s32.totalorder %s25, %s28
      %p37 = scmp.eq.s32.totalorder %s20, 1
      %p38 = por %p36, %p37
      %p39 = scmp.ne.s32.totalorder %s28, %s29
      %p40 = scmp.eq.s32.totalorder %s20, 0
      %p41 = por %p39, %p40
      %p42 = scmp.ne.s32.totalorder %s28, %s29
      %p43 = scmp.eq.s32.totalorder %s21, 1
      %p44 = por %p42, %p43
      %p46 = scmp.ne.s32.totalorder %s29, %s45
      %p47 = scmp.eq.s32.totalorder %s21, 0
      %p48 = por %p46, %p47
      %s50 = sadd.s32 %s49, 1
      %p53 = scmp.eq.s32.totalorder %s15, 1
      %p54 = scmp.ne.s32.totalorder %s49, %s51
      %p55 = scmp.eq.s32.totalorder %s15, 0
      %p56 = por %p54, %p55
      %p57 = scmp.ne.s32.totalorder %s49, %s51
      %p58 = scmp.eq.s32.totalorder %s20, 1
      %p59 = por %p57, %p58
      %p60 = scmp.ne.s32.totalorder %s51, %s52
      %p61 = scmp.eq.s32.totalorder %s20, 0
      %p62 = por %p60, %p61
      %p63 = scmp.ne.s32.totalorder %s51, %s52
      %p64 = scmp.eq.s32.totalorder %s21, 1
      %p65 = por %p63, %p64
      %p67 = scmp.ne.s32.totalorder %s52, %s66
      %p68 = scmp.eq.s32.totalorder %s21, 0
      %p69 = por %p67, %p68
      %s70 = ssub.s32 %s15, %s22
      %p71 = scmp.eq.s32.totalorder %s70, 0
      %s73 = sadd.s32 %s72, 1
      %s74 = scalar_select %p71, %s72, %s73
      %p77 = pneg %p71
      %p78 = scmp.eq.s32.totalorder %s15, 1
      %p79 = por %p77, %p78
      %p80 = scmp.ne.s32.totalorder %s72, %s75
      %p81 = scmp.eq.s32.totalorder %s15, 0
      %p82 = por %p80, %p81
      %p83 = scmp.ne.s32.totalorder %s72, %s75
      %p84 = scmp.eq.s32.totalorder %s20, 1
      %p85 = por %p83, %p84
      %p86 = scmp.ne.s32.totalorder %s75, %s76
      %p87 = scmp.eq.s32.totalorder %s20, 0
      %p88 = por %p86, %p87
      %p89 = scmp.ne.s32.totalorder %s75, %s76
      %p90 = scmp.eq.s32.totalorder %s21, 1
      %p91 = por %p89, %p90
      %p93 = scmp.ne.s32.totalorder %s76, %s92
      %p94 = scmp.eq.s32.totalorder %s21, 0
      %p95 = por %p93, %p94
      %p96 = scmp.le.s32.totalorder 1, %s15
      %p97 = scmp.lt.s32.totalorder %s15, 3
      %p98 = pnand %p96, %p97
      %p99 = pneg %p98
      // Predicated region
      $region9: #{tpu_custom_call.1} parent=5 // pred_check
        _
      $region10: #{tpu_custom_call.1} parent=5 // pred_check_branch
        %101 = sbr.rel (%p98) target = $region12
      $region11: #{tpu_custom_call.1} parent=5 // pred_region
        %s102 = ssub.s32 %s15, 1
        // Predicated region
        $region13: #{tpu_custom_call.1} parent=11 // pred_check
          %p103 = pneg %p62
        $region14: #{tpu_custom_call.1} parent=11 // pred_check_branch
          %105 = sbr.rel (%p103) target = $region16
        $region15: #{tpu_custom_call.1} parent=11 // pred_region
          %s107 = ssub.s32 7168, 7168
          %108 = vsyncadd [#allocation6], %s107
          %s109 = sshll.u32 [#allocation5], 4
          %s110 = int_to_ptr.vmem [resolvable:$true] %s109
          %115 = dma.hbm_to_vmem [thread:$0]  %s1, 7168, %s110, [#allocation6], 128, 128, 8
        $region16: #{tpu_custom_call.1} parent=11 // pred_fallthru
          _
      $region12: #{tpu_custom_call.1} parent=5 // pred_fallthru
        _
      %p116 = scmp.lt.s32.totalorder %s15, 2
      // Predicated region
      $region17: #{tpu_custom_call.1} parent=5 // pred_check
        %p117 = pneg %p116
      $region18: #{tpu_custom_call.1} parent=5 // pred_check_branch
        %119 = sbr.rel (%p117) target = $region20
      $region19: #{tpu_custom_call.1} parent=5 // pred_region
        // Predicated region
        $region21: #{tpu_custom_call.1} parent=19 // pred_check
          %p120 = pneg %p35
        $region22: #{tpu_custom_call.1} parent=19 // pred_check_branch
          %122 = sbr.rel (%p120) target = $region24
        $region23: #{tpu_custom_call.1} parent=19 // pred_region
          %s123 = sand.u32 %s25, 1
          %s124 = scalar_lea.sflag [#allocation3], %s123
          %s125 = sand.u32 %s25, 1
          %s126 = smul.addr %s125, 8
          %s127 = scalar_lea.vmem [#allocation2], %s126
          %s129 = ssub.s32 128, 128
          %130 = vsyncadd %s124, %s129
          %s131 = smul.addr %s15, 128
          %s132 = scalar_lea.hbm %s0, %s131
          %s134 = sshll.u32 %s127, 4
          %s135 = int_to_ptr.vmem [resolvable:$true] %s134
          %137 = dma.hbm_to_vmem [thread:$0]  %s132, 128, %s135, %s124
        $region24: #{tpu_custom_call.1} parent=19 // pred_fallthru
          _
      $region20: #{tpu_custom_call.1} parent=5 // pred_fallthru
        _
      %p138 = scmp.le.s32.totalorder 1, %s15
      %p139 = scmp.lt.s32.totalorder %s15, 3
      %p140 = pnand %p138, %p139
      %p141 = pneg %p140
      // Predicated region
      $region25: #{tpu_custom_call.1} parent=5 // pred_check
        _
      $region26: #{tpu_custom_call.1} parent=5 // pred_check_branch
        %143 = sbr.rel (%p140) target = $region28
      $region27: #{tpu_custom_call.1} parent=5 // pred_region
        %s144 = ssub.s32 %s15, 1
        %s145 = sand.u32 %s28, 1
        %s146 = scalar_lea.sflag [#allocation3], %s145
        %s147 = sand.u32 %s28, 1
        %s148 = smul.addr %s147, 8
        %s149 = scalar_lea.vmem [#allocation2], %s148
        // Predicated region
        $region29: #{tpu_custom_call.1} parent=27 // pred_check
          %p150 = pneg %p41
        $region30: #{tpu_custom_call.1} parent=27 // pred_check_branch
          %152 = sbr.rel (%p150) target = $region32
        $region31: #{tpu_custom_call.1} parent=27 // pred_region
          %153 = dma.done %s146, 128
        $region32: #{tpu_custom_call.1} parent=27 // pred_fallthru
          _
        // Predicated region
        $region33: #{tpu_custom_call.1} parent=27 // pred_check
          %p154 = pneg %p62
        $region34: #{tpu_custom_call.1} parent=27 // pred_check_branch
          %156 = sbr.rel (%p154) target = $region36
        $region35: #{tpu_custom_call.1} parent=27 // pred_region
          %157 = dma.done [#allocation6], 7168
        $region36: #{tpu_custom_call.1} parent=27 // pred_fallthru
          _
        %s158 = sand.u32 %s28, 1
        %s159 = scalar_lea.sflag [#allocation3], %s158
        %s160 = sand.u32 %s28, 1
        %s161 = smul.addr %s160, 8
        %s162 = scalar_lea.vmem [#allocation2], %s161
        %p163 = pneg %p41
        %p164 = pneg %p38
        %p165 = pneg %p62
        %p166 = pneg %p59
        %p167 = pneg %p88
        %p168 = pneg %p85
        %s169 = sand.u32 %s75, 1
        %s170 = scalar_lea.sflag [#allocation4], %s169
        %s171 = sand.u32 %s75, 1
        %s172 = smul.addr %s171, 8
        %s173 = scalar_lea.vmem [#allocation7], %s172
        %v174 = vld [vmem:[%s149] sm:$0xff]
        %v175 = vld [vmem:[#allocation5] sm:$0xff]
        %v176 = vld [vmem:[#allocation5 + $0x8] sm:$0xff]
        %v177 = vld [vmem:[#allocation5 + $0x10] sm:$0xff]
        %v178 = vld [vmem:[#allocation5 + $0x18] sm:$0xff]
        %v179 = vld [vmem:[#allocation5 + $0x20] sm:$0xff]
        %v180 = vld [vmem:[#allocation5 + $0x28] sm:$0xff]
        %v181 = vld [vmem:[#allocation5 + $0x30] sm:$0xff]
        %v182 = vld [vmem:[#allocation5 + $0x38] sm:$0xff]
        %v183 = vld [vmem:[#allocation5 + $0x40] sm:$0xff]
        %v184 = vld [vmem:[#allocation5 + $0x48] sm:$0xff]
        %v185 = vld [vmem:[#allocation5 + $0x50] sm:$0xff]
        %v186 = vld [vmem:[#allocation5 + $0x58] sm:$0xff]
        %v187 = vld [vmem:[#allocation5 + $0x60] sm:$0xff]
        %v188 = vld [vmem:[#allocation5 + $0x68] sm:$0xff]
        %v189 = vld [vmem:[#allocation5 + $0x70] sm:$0xff]
        %v190 = vld [vmem:[#allocation5 + $0x78] sm:$0xff]
        %v191 = vld [vmem:[#allocation5 + $0x80] sm:$0x1]
        %v192 = vlaneseq
        %v193 = vshrl.u32 %v192, 7
        %v194 = vsub.s32 0, %v193
        %v195 = vrot.slane %v191, %v194
        %196 = vmatprep.subr.mxu0 0.0
        %197 = vmatpush1.msra.mxu0 %v175
        %198 = vmatprep.subr.mxu0 0.0
        %199 = vmatpush1.msra.mxu0 %v176
        %200 = vmatprep.subr.mxu0 0.0
        %201 = vmatpush1.msra.mxu0 %v177
        %202 = vmatprep.subr.mxu0 0.0
        %203 = vmatpush1.msra.mxu0 %v178
        %204 = vmatprep.subr.mxu0 0.0
        %205 = vmatpush1.msra.mxu0 %v179
        %206 = vmatprep.subr.mxu0 0.0
        %207 = vmatpush1.msra.mxu0 %v180
        %208 = vmatprep.subr.mxu0 0.0
        %209 = vmatpush1.msra.mxu0 %v181
        %210 = vmatprep.subr.mxu0 0.0
        %211 = vmatpush1.msra.mxu0 %v182
        %212 = vmatprep.subr.mxu0 0.0
        %213 = vmatpush1.msra.mxu0 %v183
        %214 = vmatprep.subr.mxu0 0.0
        %215 = vmatpush1.msra.mxu0 %v184
        %216 = vmatprep.subr.mxu0 0.0
        %217 = vmatpush1.msra.mxu0 %v185
        %218 = vmatprep.subr.mxu0 0.0
        %219 = vmatpush1.msra.mxu0 %v186
        %220 = vmatprep.subr.mxu0 0.0
        %221 = vmatpush1.msra.mxu0 %v187
        %222 = vmatprep.subr.mxu0 0.0
        %223 = vmatpush1.msra.mxu0 %v188
        %224 = vmatprep.subr.mxu0 0.0
        %225 = vmatpush1.msra.mxu0 %v189
        %226 = vmatprep.subr.mxu0 0.0
        %227 = vmatpush1.msra.mxu0 %v190
        %228 = vmatprep.subr.mxu0 0.0
        %229 = vmatpush1.msra.mxu0 0.0
        %230 = vmatprep.subr.mxu0 0.0
        %231 = vmatpush1.msra.mxu0 0.0
        %232 = vmatprep.subr.mxu0 0.0
        %233 = vmatpush1.msra.mxu0 0.0
        %234 = vmatprep.subr.mxu0 0.0
        %235 = vmatpush1.msra.mxu0 0.0
        %236 = vmatprep.subr.mxu0 0.0
        %237 = vmatpush1.msra.mxu0 0.0
        %238 = vmatprep.subr.mxu0 0.0
        %239 = vmatpush1.msra.mxu0 0.0
        %240 = vmatprep.subr.mxu0 0.0
        %241 = vmatpush1.msra.mxu0 0.0
        %242 = vmatprep.subr.mxu0 0.0
        %243 = vmatpush1.msra.mxu0 0.0
        %244 = vmatprep.subr.mxu0 0.0
        %245 = vmatpush1.msra.mxu0 0.0
        %246 = vmatprep.subr.mxu0 0.0
        %247 = vmatpush1.msra.mxu0 0.0
        %248 = vmatprep.subr.mxu0 0.0
        %249 = vmatpush1.msra.mxu0 0.0
        %250 = vmatprep.subr.mxu0 0.0
        %251 = vmatpush1.msra.mxu0 0.0
        %252 = vmatprep.subr.mxu0 0.0
        %253 = vmatpush1.msra.mxu0 0.0
        %254 = vmatprep.subr.mxu0 0.0
        %255 = vmatpush1.msra.mxu0 0.0
        %256 = vmatprep.subr.mxu0 0.0
        %257 = vmatpush1.msra.mxu0 0.0
        %258 = vmatprep.subr.mxu0 0.0
        %259 = vmatpush1.msra.mxu0 0.0
        %260 = vmatprep.mubr.f32.mxu0 0.0
        %261 = vmatmul.mubr.f32.gmra.mrb[0].mxu0 %v174
        %v262 = vpop.f32.mrb[0].mxu0
        %v263 = vadd.f32 %v195, %v262
        %v264 = vpop.f32.mrb[0].mxu0
        %265 = vdwg.mxu0
        %v266 = vld [vmem:[#allocation5 + $0xa8] sm:$0x1]
        %v267 = vlaneseq
        %v268 = vshrl.u32 %v267, 7
        %v269 = vsub.s32 0, %v268
        %v270 = vrot.slane %v266, %v269
        %v271 = vadd.f32 %v174, %v270
        %273 = vrot.lane.b32.xlu0 %v263, 96
        %v274 = vpop.permute.xlu0 %273
        %vm275 = vcmask 64512
        %v276 = vsel %vm275, %v263, 0
        %v278 = vsel %vm275, %v274, 0
        %280 = vmatprep.subr.mxu0 0.0
        %281 = vmatpush1.xpose.msra.mxu0 %v278
        %282 = vmatprep.subr.mxu0 0.0
        %283 = vmatpush1.xpose.msra.mxu0 0.0
        %284 = vmatprep.subr.mxu0 0.0
        %285 = vmatpush1.xpose.msra.mxu0 0.0
        %286 = vmatprep.subr.mxu0 0.0
        %287 = vmatpush1.xpose.msra.mxu0 0.0
        %288 = vmatprep.subr.mxu0 0.0
        %289 = vmatpush1.xpose.msra.mxu0 0.0
        %290 = vmatprep.subr.mxu0 0.0
        %291 = vmatpush1.xpose.msra.mxu0 0.0
        %292 = vmatprep.subr.mxu0 0.0
        %293 = vmatpush1.xpose.msra.mxu0 0.0
        %294 = vmatprep.subr.mxu0 0.0
        %295 = vmatpush1.xpose.msra.mxu0 0.0
        %296 = vmatprep.subr.mxu0 0.0
        %297 = vmatpush1.xpose.msra.mxu0 0.0
        %298 = vmatprep.subr.mxu0 0.0
        %299 = vmatpush1.xpose.msra.mxu0 0.0
        %300 = vmatprep.subr.mxu0 0.0
        %301 = vmatpush1.xpose.msra.mxu0 0.0
        %302 = vmatprep.subr.mxu0 0.0
        %303 = vmatpush1.xpose.msra.mxu0 0.0
        %304 = vmatprep.subr.mxu0 0.0
        %305 = vmatpush1.xpose.msra.mxu0 0.0
        %306 = vmatprep.subr.mxu0 0.0
        %307 = vmatpush1.xpose.msra.mxu0 0.0
        %308 = vmatprep.subr.mxu0 0.0
        %309 = vmatpush1.xpose.msra.mxu0 0.0
        %310 = vmatprep.subr.mxu0 0.0
        %311 = vmatpush1.xpose.msra.mxu0 0.0
        %312 = vmatprep.subr.mxu0 0.0
        %313 = vmatpush1.xpose.msra.mxu0 0.0
        %314 = vmatprep.subr.mxu0 0.0
        %315 = vmatpush1.xpose.msra.mxu0 0.0
        %316 = vmatprep.subr.mxu0 0.0
        %317 = vmatpush1.xpose.msra.mxu0 0.0
        %318 = vmatprep.subr.mxu0 0.0
        %319 = vmatpush1.xpose.msra.mxu0 0.0
        %320 = vmatprep.subr.mxu0 0.0
        %321 = vmatpush1.xpose.msra.mxu0 0.0
        %322 = vmatprep.subr.mxu0 0.0
        %323 = vmatpush1.xpose.msra.mxu0 0.0
        %324 = vmatprep.subr.mxu0 0.0
        %325 = vmatpush1.xpose.msra.mxu0 0.0
        %326 = vmatprep.subr.mxu0 0.0
        %327 = vmatpush1.xpose.msra.mxu0 0.0
        %328 = vmatprep.subr.mxu0 0.0
        %329 = vmatpush1.xpose.msra.mxu0 0.0
        %330 = vmatprep.subr.mxu0 0.0
        %331 = vmatpush1.xpose.msra.mxu0 0.0
        %332 = vmatprep.subr.mxu0 0.0
        %333 = vmatpush1.xpose.msra.mxu0 0.0
        %334 = vmatprep.subr.mxu0 0.0
        %335 = vmatpush1.xpose.msra.mxu0 0.0
        %336 = vmatprep.subr.mxu0 0.0
        %337 = vmatpush1.xpose.msra.mxu0 0.0
        %338 = vmatprep.subr.mxu0 0.0
        %339 = vmatpush1.xpose.msra.mxu0 0.0
        %340 = vmatprep.subr.mxu0 0.0
        %341 = vmatpush1.xpose.msra.mxu0 0.0
        %342 = vmatprep.subr.mxu0 0.0
        %343 = vmatpush1.xpose.msra.mxu0 0.0
        %344 = vmatprep.mubr.f32.mxu0 0.0
        %345 = vmatmul.mubr.f32.gmra.mrb[0].mxu0 %v276
        %v346 = vpop.f32.mrb[0].mxu0
        %v347 = vadd.f32 0.0, %v346
        %v348 = vpop.f32.mrb[0].mxu0
        %349 = vdwg.mxu0
        %v350 = vsel %vm275, %v347, -inf
        %351 = vmax.xlane.f32.xlu0 %v350
        %v352 = vpop.xlane.xlu0 %351
        %v353 = vsub.f32 %v347, %v352
        %v354 = vmul.f32 %v353, 1.442695
        %v355 = vpow.pop %v354
        %v356 = vsel %vm275, %v355, 0.0
        %357 = vadd.xlane.f32.xlu0 %v356
        %v358 = vpop.xlane.xlu0 %357
        %v359 = vrcp.pop %v358
        %v360 = vmul.f32 %v355, %v359
        %361 = vrot.lane.b32.xlu0 %v263, 64
        %v362 = vpop.permute.xlu0 %361
        %v365 = vsel %vm275, %v360, 0
        %367 = vmatprep.subr.mxu0 0.0
        %368 = vmatpush1.msra.mxu0 %v362
        %369 = vmatprep.subr.mxu0 0.0
        %370 = vmatpush1.msra.mxu0 0.0
        %371 = vmatprep.subr.mxu0 0.0
        %372 = vmatpush1.msra.mxu0 0.0
        %373 = vmatprep.subr.mxu0 0.0
        %374 = vmatpush1.msra.mxu0 0.0
        %375 = vmatprep.subr.mxu0 0.0
        %376 = vmatpush1.msra.mxu0 0.0
        %377 = vmatprep.subr.mxu0 0.0
        %378 = vmatpush1.msra.mxu0 0.0
        %379 = vmatprep.subr.mxu0 0.0
        %380 = vmatpush1.msra.mxu0 0.0
        %381 = vmatprep.subr.mxu0 0.0
        %382 = vmatpush1.msra.mxu0 0.0
        %383 = vmatprep.subr.mxu0 0.0
        %384 = vmatpush1.msra.mxu0 0.0
        %385 = vmatprep.subr.mxu0 0.0
        %386 = vmatpush1.msra.mxu0 0.0
        %387 = vmatprep.subr.mxu0 0.0
        %388 = vmatpush1.msra.mxu0 0.0
        %389 = vmatprep.subr.mxu0 0.0
        %390 = vmatpush1.msra.mxu0 0.0
        %391 = vmatprep.subr.mxu0 0.0
        %392 = vmatpush1.msra.mxu0 0.0
        %393 = vmatprep.subr.mxu0 0.0
        %394 = vmatpush1.msra.mxu0 0.0
        %395 = vmatprep.subr.mxu0 0.0
        %396 = vmatpush1.msra.mxu0 0.0
        %397 = vmatprep.subr.mxu0 0.0
        %398 = vmatpush1.msra.mxu0 0.0
        %399 = vmatprep.subr.mxu0 0.0
        %400 = vmatpush1.msra.mxu0 0.0
        %401 = vmatprep.subr.mxu0 0.0
        %402 = vmatpush1.msra.mxu0 0.0
        %403 = vmatprep.subr.mxu0 0.0
        %404 = vmatpush1.msra.mxu0 0.0
        %405 = vmatprep.subr.mxu0 0.0
        %406 = vmatpush1.msra.mxu0 0.0
        %407 = vmatprep.subr.mxu0 0.0
        %408 = vmatpush1.msra.mxu0 0.0
        %409 = vmatprep.subr.mxu0 0.0
        %410 = vmatpush1.msra.mxu0 0.0
        %411 = vmatprep.subr.mxu0 0.0
        %412 = vmatpush1.msra.mxu0 0.0
        %413 = vmatprep.subr.mxu0 0.0
        %414 = vmatpush1.msra.mxu0 0.0
        %415 = vmatprep.subr.mxu0 0.0
        %416 = vmatpush1.msra.mxu0 0.0
        %417 = vmatprep.subr.mxu0 0.0
        %418 = vmatpush1.msra.mxu0 0.0
        %419 = vmatprep.subr.mxu0 0.0
        %420 = vmatpush1.msra.mxu0 0.0
        %421 = vmatprep.subr.mxu0 0.0
        %422 = vmatpush1.msra.mxu0 0.0
        %423 = vmatprep.subr.mxu0 0.0
        %424 = vmatpush1.msra.mxu0 0.0
        %425 = vmatprep.subr.mxu0 0.0
        %426 = vmatpush1.msra.mxu0 0.0
        %427 = vmatprep.subr.mxu0 0.0
        %428 = vmatpush1.msra.mxu0 0.0
        %429 = vmatprep.subr.mxu0 0.0
        %430 = vmatpush1.msra.mxu0 0.0
        %431 = vmatprep.mubr.f32.mxu0 0.0
        %432 = vmatmul.mubr.f32.gmra.mrb[0].mxu0 %v365
        %v433 = vpop.f32.mrb[0].mxu0
        %v434 = vadd.f32 0.0, %v433
        %v435 = vpop.f32.mrb[0].mxu0
        %436 = vdwg.mxu0
        %v437 = vld [vmem:[#allocation5 + $0x88] sm:$0xff]
        %v439 = vsel %vm275, %v434, 0
        %441 = vmatprep.subr.mxu0 0.0
        %442 = vmatpush1.msra.mxu0 %v437
        %443 = vmatprep.subr.mxu0 0.0
        %444 = vmatpush1.msra.mxu0 0.0
        %445 = vmatprep.subr.mxu0 0.0
        %446 = vmatpush1.msra.mxu0 0.0
        %447 = vmatprep.subr.mxu0 0.0
        %448 = vmatpush1.msra.mxu0 0.0
        %449 = vmatprep.subr.mxu0 0.0
        %450 = vmatpush1.msra.mxu0 0.0
        %451 = vmatprep.subr.mxu0 0.0
        %452 = vmatpush1.msra.mxu0 0.0
        %453 = vmatprep.subr.mxu0 0.0
        %454 = vmatpush1.msra.mxu0 0.0
        %455 = vmatprep.subr.mxu0 0.0
        %456 = vmatpush1.msra.mxu0 0.0
        %457 = vmatprep.subr.mxu0 0.0
        %458 = vmatpush1.msra.mxu0 0.0
        %459 = vmatprep.subr.mxu0 0.0
        %460 = vmatpush1.msra.mxu0 0.0
        %461 = vmatprep.subr.mxu0 0.0
        %462 = vmatpush1.msra.mxu0 0.0
        %463 = vmatprep.subr.mxu0 0.0
        %464 = vmatpush1.msra.mxu0 0.0
        %465 = vmatprep.subr.mxu0 0.0
        %466 = vmatpush1.msra.mxu0 0.0
        %467 = vmatprep.subr.mxu0 0.0
        %468 = vmatpush1.msra.mxu0 0.0
        %469 = vmatprep.subr.mxu0 0.0
        %470 = vmatpush1.msra.mxu0 0.0
        %471 = vmatprep.subr.mxu0 0.0
        %472 = vmatpush1.msra.mxu0 0.0
        %473 = vmatprep.subr.mxu0 0.0
        %474 = vmatpush1.msra.mxu0 0.0
        %475 = vmatprep.subr.mxu0 0.0
        %476 = vmatpush1.msra.mxu0 0.0
        %477 = vmatprep.subr.mxu0 0.0
        %478 = vmatpush1.msra.mxu0 0.0
        %479 = vmatprep.subr.mxu0 0.0
        %480 = vmatpush1.msra.mxu0 0.0
        %481 = vmatprep.subr.mxu0 0.0
        %482 = vmatpush1.msra.mxu0 0.0
        %483 = vmatprep.subr.mxu0 0.0
        %484 = vmatpush1.msra.mxu0 0.0
        %485 = vmatprep.subr.mxu0 0.0
        %486 = vmatpush1.msra.mxu0 0.0
        %487 = vmatprep.subr.mxu0 0.0
        %488 = vmatpush1.msra.mxu0 0.0
        %489 = vmatprep.subr.mxu0 0.0
        %490 = vmatpush1.msra.mxu0 0.0
        %491 = vmatprep.subr.mxu0 0.0
        %492 = vmatpush1.msra.mxu0 0.0
        %493 = vmatprep.subr.mxu0 0.0
        %494 = vmatpush1.msra.mxu0 0.0
        %495 = vmatprep.subr.mxu0 0.0
        %496 = vmatpush1.msra.mxu0 0.0
        %497 = vmatprep.subr.mxu0 0.0
        %498 = vmatpush1.msra.mxu0 0.0
        %499 = vmatprep.subr.mxu0 0.0
        %500 = vmatpush1.msra.mxu0 0.0
        %501 = vmatprep.subr.mxu0 0.0
        %502 = vmatpush1.msra.mxu0 0.0
        %503 = vmatprep.subr.mxu0 0.0
        %504 = vmatpush1.msra.mxu0 0.0
        %505 = vmatprep.mubr.f32.mxu0 0.0
        %506 = vmatmul.mubr.f32.gmra.mrb[0].mxu0 %v439
        %v507 = vpop.f32.mrb[0].mxu0
        %v508 = vadd.f32 0.0, %v507
        %v509 = vpop.f32.mrb[0].mxu0
        %510 = vdwg.mxu0
        %v511 = vadd.f32 %v271, %v508
        %512 = vrot.lane.b32.xlu0 %v263, 120
        %v513 = vpop.permute.xlu0 %512
        %514 = vrot.lane.b32.xlu0 %v263, 88
        %v515 = vpop.permute.xlu0 %514
        %v516 = vsel %vm275, %v513, 0
        %v518 = vsel %vm275, %v515, 0
        %520 = vmatprep.subr.mxu0 0.0
        %521 = vmatpush1.xpose.msra.mxu0 %v518
        %522 = vmatprep.subr.mxu0 0.0
        %523 = vmatpush1.xpose.msra.mxu0 0.0
        %524 = vmatprep.subr.mxu0 0.0
        %525 = vmatpush1.xpose.msra.mxu0 0.0
        %526 = vmatprep.subr.mxu0 0.0
        %527 = vmatpush1.xpose.msra.mxu0 0.0
        %528 = vmatprep.subr.mxu0 0.0
        %529 = vmatpush1.xpose.msra.mxu0 0.0
        %530 = vmatprep.subr.mxu0 0.0
        %531 = vmatpush1.xpose.msra.mxu0 0.0
        %532 = vmatprep.subr.mxu0 0.0
        %533 = vmatpush1.xpose.msra.mxu0 0.0
        %534 = vmatprep.subr.mxu0 0.0
        %535 = vmatpush1.xpose.msra.mxu0 0.0
        %536 = vmatprep.subr.mxu0 0.0
        %537 = vmatpush1.xpose.msra.mxu0 0.0
        %538 = vmatprep.subr.mxu0 0.0
        %539 = vmatpush1.xpose.msra.mxu0 0.0
        %540 = vmatprep.subr.mxu0 0.0
        %541 = vmatpush1.xpose.msra.mxu0 0.0
        %542 = vmatprep.subr.mxu0 0.0
        %543 = vmatpush1.xpose.msra.mxu0 0.0
        %544 = vmatprep.subr.mxu0 0.0
        %545 = vmatpush1.xpose.msra.mxu0 0.0
        %546 = vmatprep.subr.mxu0 0.0
        %547 = vmatpush1.xpose.msra.mxu0 0.0
        %548 = vmatprep.subr.mxu0 0.0
        %549 = vmatpush1.xpose.msra.mxu0 0.0
        %550 = vmatprep.subr.mxu0 0.0
        %551 = vmatpush1.xpose.msra.mxu0 0.0
        %552 = vmatprep.subr.mxu0 0.0
        %553 = vmatpush1.xpose.msra.mxu0 0.0
        %554 = vmatprep.subr.mxu0 0.0
        %555 = vmatpush1.xpose.msra.mxu0 0.0
        %556 = vmatprep.subr.mxu0 0.0
        %557 = vmatpush1.xpose.msra.mxu0 0.0
        %558 = vmatprep.subr.mxu0 0.0
        %559 = vmatpush1.xpose.msra.mxu0 0.0
        %560 = vmatprep.subr.mxu0 0.0
        %561 = vmatpush1.xpose.msra.mxu0 0.0
        %562 = vmatprep.subr.mxu0 0.0
        %563 = vmatpush1.xpose.msra.mxu0 0.0
        %564 = vmatprep.subr.mxu0 0.0
        %565 = vmatpush1.xpose.msra.mxu0 0.0
        %566 = vmatprep.subr.mxu0 0.0
        %567 = vmatpush1.xpose.msra.mxu0 0.0
        %568 = vmatprep.subr.mxu0 0.0
        %569 = vmatpush1.xpose.msra.mxu0 0.0
        %570 = vmatprep.subr.mxu0 0.0
        %571 = vmatpush1.xpose.msra.mxu0 0.0
        %572 = vmatprep.subr.mxu0 0.0
        %573 = vmatpush1.xpose.msra.mxu0 0.0
        %574 = vmatprep.subr.mxu0 0.0
        %575 = vmatpush1.xpose.msra.mxu0 0.0
        %576 = vmatprep.subr.mxu0 0.0
        %577 = vmatpush1.xpose.msra.mxu0 0.0
        %578 = vmatprep.subr.mxu0 0.0
        %579 = vmatpush1.xpose.msra.mxu0 0.0
        %580 = vmatprep.subr.mxu0 0.0
        %581 = vmatpush1.xpose.msra.mxu0 0.0
        %582 = vmatprep.subr.mxu0 0.0
        %583 = vmatpush1.xpose.msra.mxu0 0.0
        %584 = vmatprep.mubr.f32.mxu0 0.0
        %585 = vmatmul.mubr.f32.gmra.mrb[0].mxu0 %v516
        %v586 = vpop.f32.mrb[0].mxu0
        %v587 = vadd.f32 0.0, %v586
        %v588 = vpop.f32.mrb[0].mxu0
        %589 = vdwg.mxu0
        %v590 = vsel %vm275, %v587, -inf
        %591 = vmax.xlane.f32.xlu0 %v590
        %v592 = vpop.xlane.xlu0 %591
        %v593 = vsub.f32 %v587, %v592
        %v594 = vmul.f32 %v593, 1.442695
        %v595 = vpow.pop %v594
        %v596 = vsel %vm275, %v595, 0.0
        %597 = vadd.xlane.f32.xlu0 %v596
        %v598 = vpop.xlane.xlu0 %597
        %v599 = vrcp.pop %v598
        %v600 = vmul.f32 %v595, %v599
        %601 = vrot.lane.b32.xlu0 %v263, 56
        %v602 = vpop.permute.xlu0 %601
        %v605 = vsel %vm275, %v600, 0
        %607 = vmatprep.subr.mxu0 0.0
        %608 = vmatpush1.msra.mxu0 %v602
        %609 = vmatprep.subr.mxu0 0.0
        %610 = vmatpush1.msra.mxu0 0.0
        %611 = vmatprep.subr.mxu0 0.0
        %612 = vmatpush1.msra.mxu0 0.0
        %613 = vmatprep.subr.mxu0 0.0
        %614 = vmatpush1.msra.mxu0 0.0
        %615 = vmatprep.subr.mxu0 0.0
        %616 = vmatpush1.msra.mxu0 0.0
        %617 = vmatprep.subr.mxu0 0.0
        %618 = vmatpush1.msra.mxu0 0.0
        %619 = vmatprep.subr.mxu0 0.0
        %620 = vmatpush1.msra.mxu0 0.0
        %621 = vmatprep.subr.mxu0 0.0
        %622 = vmatpush1.msra.mxu0 0.0
        %623 = vmatprep.subr.mxu0 0.0
        %624 = vmatpush1.msra.mxu0 0.0
        %625 = vmatprep.subr.mxu0 0.0
        %626 = vmatpush1.msra.mxu0 0.0
        %627 = vmatprep.subr.mxu0 0.0
        %628 = vmatpush1.msra.mxu0 0.0
        %629 = vmatprep.subr.mxu0 0.0
        %630 = vmatpush1.msra.mxu0 0.0
        %631 = vmatprep.subr.mxu0 0.0
        %632 = vmatpush1.msra.mxu0 0.0
        %633 = vmatprep.subr.mxu0 0.0
        %634 = vmatpush1.msra.mxu0 0.0
        %635 = vmatprep.subr.mxu0 0.0
        %636 = vmatpush1.msra.mxu0 0.0
        %637 = vmatprep.subr.mxu0 0.0
        %638 = vmatpush1.msra.mxu0 0.0
        %639 = vmatprep.subr.mxu0 0.0
        %640 = vmatpush1.msra.mxu0 0.0
        %641 = vmatprep.subr.mxu0 0.0
        %642 = vmatpush1.msra.mxu0 0.0
        %643 = vmatprep.subr.mxu0 0.0
        %644 = vmatpush1.msra.mxu0 0.0
        %645 = vmatprep.subr.mxu0 0.0
        %646 = vmatpush1.msra.mxu0 0.0
        %647 = vmatprep.subr.mxu0 0.0
        %648 = vmatpush1.msra.mxu0 0.0
        %649 = vmatprep.subr.mxu0 0.0
        %650 = vmatpush1.msra.mxu0 0.0
        %651 = vmatprep.subr.mxu0 0.0
        %652 = vmatpush1.msra.mxu0 0.0
        %653 = vmatprep.subr.mxu0 0.0
        %654 = vmatpush1.msra.mxu0 0.0
        %655 = vmatprep.subr.mxu0 0.0
        %656 = vmatpush1.msra.mxu0 0.0
        %657 = vmatprep.subr.mxu0 0.0
        %658 = vmatpush1.msra.mxu0 0.0
        %659 = vmatprep.subr.mxu0 0.0
        %660 = vmatpush1.msra.mxu0 0.0
        %661 = vmatprep.subr.mxu0 0.0
        %662 = vmatpush1.msra.mxu0 0.0
        %663 = vmatprep.subr.mxu0 0.0
        %664 = vmatpush1.msra.mxu0 0.0
        %665 = vmatprep.subr.mxu0 0.0
        %666 = vmatpush1.msra.mxu0 0.0
        %667 = vmatprep.subr.mxu0 0.0
        %668 = vmatpush1.msra.mxu0 0.0
        %669 = vmatprep.subr.mxu0 0.0
        %670 = vmatpush1.msra.mxu0 0.0
        %671 = vmatprep.mubr.f32.mxu0 0.0
        %672 = vmatmul.mubr.f32.gmra.mrb[0].mxu0 %v605
        %v673 = vpop.f32.mrb[0].mxu0
        %v674 = vadd.f32 0.0, %v673
        %v675 = vpop.f32.mrb[0].mxu0
        %676 = vdwg.mxu0
        %v677 = vld [vmem:[#allocation5 + $0x90] sm:$0xff]
        %v679 = vsel %vm275, %v674, 0
        %681 = vmatprep.subr.mxu0 0.0
        %682 = vmatpush1.msra.mxu0 %v677
        %683 = vmatprep.subr.mxu0 0.0
        %684 = vmatpush1.msra.mxu0 0.0
        %685 = vmatprep.subr.mxu0 0.0
        %686 = vmatpush1.msra.mxu0 0.0
        %687 = vmatprep.subr.mxu0 0.0
        %688 = vmatpush1.msra.mxu0 0.0
        %689 = vmatprep.subr.mxu0 0.0
        %690 = vmatpush1.msra.mxu0 0.0
        %691 = vmatprep.subr.mxu0 0.0
        %692 = vmatpush1.msra.mxu0 0.0
        %693 = vmatprep.subr.mxu0 0.0
        %694 = vmatpush1.msra.mxu0 0.0
        %695 = vmatprep.subr.mxu0 0.0
        %696 = vmatpush1.msra.mxu0 0.0
        %697 = vmatprep.subr.mxu0 0.0
        %698 = vmatpush1.msra.mxu0 0.0
        %699 = vmatprep.subr.mxu0 0.0
        %700 = vmatpush1.msra.mxu0 0.0
        %701 = vmatprep.subr.mxu0 0.0
        %702 = vmatpush1.msra.mxu0 0.0
        %703 = vmatprep.subr.mxu0 0.0
        %704 = vmatpush1.msra.mxu0 0.0
        %705 = vmatprep.subr.mxu0 0.0
        %706 = vmatpush1.msra.mxu0 0.0
        %707 = vmatprep.subr.mxu0 0.0
        %708 = vmatpush1.msra.mxu0 0.0
        %709 = vmatprep.subr.mxu0 0.0
        %710 = vmatpush1.msra.mxu0 0.0
        %711 = vmatprep.subr.mxu0 0.0
        %712 = vmatpush1.msra.mxu0 0.0
        %713 = vmatprep.subr.mxu0 0.0
        %714 = vmatpush1.msra.mxu0 0.0
        %715 = vmatprep.subr.mxu0 0.0
        %716 = vmatpush1.msra.mxu0 0.0
        %717 = vmatprep.subr.mxu0 0.0
        %718 = vmatpush1.msra.mxu0 0.0
        %719 = vmatprep.subr.mxu0 0.0
        %720 = vmatpush1.msra.mxu0 0.0
        %721 = vmatprep.subr.mxu0 0.0
        %722 = vmatpush1.msra.mxu0 0.0
        %723 = vmatprep.subr.mxu0 0.0
        %724 = vmatpush1.msra.mxu0 0.0
        %725 = vmatprep.subr.mxu0 0.0
        %726 = vmatpush1.msra.mxu0 0.0
        %727 = vmatprep.subr.mxu0 0.0
        %728 = vmatpush1.msra.mxu0 0.0
        %729 = vmatprep.subr.mxu0 0.0
        %730 = vmatpush1.msra.mxu0 0.0
        %731 = vmatprep.subr.mxu0 0.0
        %732 = vmatpush1.msra.mxu0 0.0
        %733 = vmatprep.subr.mxu0 0.0
        %734 = vmatpush1.msra.mxu0 0.0
        %735 = vmatprep.subr.mxu0 0.0
        %736 = vmatpush1.msra.mxu0 0.0
        %737 = vmatprep.subr.mxu0 0.0
        %738 = vmatpush1.msra.mxu0 0.0
        %739 = vmatprep.subr.mxu0 0.0
        %740 = vmatpush1.msra.mxu0 0.0
        %741 = vmatprep.subr.mxu0 0.0
        %742 = vmatpush1.msra.mxu0 0.0
        %743 = vmatprep.subr.mxu0 0.0
        %744 = vmatpush1.msra.mxu0 0.0
        %745 = vmatprep.mubr.f32.mxu0 0.0
        %746 = vmatmul.mubr.f32.gmra.mrb[0].mxu0 %v679
        %v747 = vpop.f32.mrb[0].mxu0
        %v748 = vadd.f32 0.0, %v747
        %v749 = vpop.f32.mrb[0].mxu0
        %750 = vdwg.mxu0
        %v751 = vadd.f32 %v511, %v748
        %752 = vrot.lane.b32.xlu0 %v263, 112
        %v753 = vpop.permute.xlu0 %752
        %754 = vrot.lane.b32.xlu0 %v263, 80
        %v755 = vpop.permute.xlu0 %754
        %v756 = vsel %vm275, %v753, 0
        %v758 = vsel %vm275, %v755, 0
        %760 = vmatprep.subr.mxu0 0.0
        %761 = vmatpush1.xpose.msra.mxu0 %v758
        %762 = vmatprep.subr.mxu0 0.0
        %763 = vmatpush1.xpose.msra.mxu0 0.0
        %764 = vmatprep.subr.mxu0 0.0
        %765 = vmatpush1.xpose.msra.mxu0 0.0
        %766 = vmatprep.subr.mxu0 0.0
        %767 = vmatpush1.xpose.msra.mxu0 0.0
        %768 = vmatprep.subr.mxu0 0.0
        %769 = vmatpush1.xpose.msra.mxu0 0.0
        %770 = vmatprep.subr.mxu0 0.0
        %771 = vmatpush1.xpose.msra.mxu0 0.0
        %772 = vmatprep.subr.mxu0 0.0
        %773 = vmatpush1.xpose.msra.mxu0 0.0
        %774 = vmatprep.subr.mxu0 0.0
        %775 = vmatpush1.xpose.msra.mxu0 0.0
        %776 = vmatprep.subr.mxu0 0.0
        %777 = vmatpush1.xpose.msra.mxu0 0.0
        %778 = vmatprep.subr.mxu0 0.0
        %779 = vmatpush1.xpose.msra.mxu0 0.0
        %780 = vmatprep.subr.mxu0 0.0
        %781 = vmatpush1.xpose.msra.mxu0 0.0
        %782 = vmatprep.subr.mxu0 0.0
        %783 = vmatpush1.xpose.msra.mxu0 0.0
        %784 = vmatprep.subr.mxu0 0.0
        %785 = vmatpush1.xpose.msra.mxu0 0.0
        %786 = vmatprep.subr.mxu0 0.0
        %787 = vmatpush1.xpose.msra.mxu0 0.0
        %788 = vmatprep.subr.mxu0 0.0
        %789 = vmatpush1.xpose.msra.mxu0 0.0
        %790 = vmatprep.subr.mxu0 0.0
        %791 = vmatpush1.xpose.msra.mxu0 0.0
        %792 = vmatprep.subr.mxu0 0.0
        %793 = vmatpush1.xpose.msra.mxu0 0.0
        %794 = vmatprep.subr.mxu0 0.0
        %795 = vmatpush1.xpose.msra.mxu0 0.0
        %796 = vmatprep.subr.mxu0 0.0
        %797 = vmatpush1.xpose.msra.mxu0 0.0
        %798 = vmatprep.subr.mxu0 0.0
        %799 = vmatpush1.xpose.msra.mxu0 0.0
        %800 = vmatprep.subr.mxu0 0.0
        %801 = vmatpush1.xpose.msra.mxu0 0.0
        %802 = vmatprep.subr.mxu0 0.0
        %803 = vmatpush1.xpose.msra.mxu0 0.0
        %804 = vmatprep.subr.mxu0 0.0
        %805 = vmatpush1.xpose.msra.mxu0 0.0
        %806 = vmatprep.subr.mxu0 0.0
        %807 = vmatpush1.xpose.msra.mxu0 0.0
        %808 = vmatprep.subr.mxu0 0.0
        %809 = vmatpush1.xpose.msra.mxu0 0.0
        %810 = vmatprep.subr.mxu0 0.0
        %811 = vmatpush1.xpose.msra.mxu0 0.0
        %812 = vmatprep.subr.mxu0 0.0
        %813 = vmatpush1.xpose.msra.mxu0 0.0
        %814 = vmatprep.subr.mxu0 0.0
        %815 = vmatpush1.xpose.msra.mxu0 0.0
        %816 = vmatprep.subr.mxu0 0.0
        %817 = vmatpush1.xpose.msra.mxu0 0.0
        %818 = vmatprep.subr.mxu0 0.0
        %819 = vmatpush1.xpose.msra.mxu0 0.0
        %820 = vmatprep.subr.mxu0 0.0
        %821 = vmatpush1.xpose.msra.mxu0 0.0
        %822 = vmatprep.subr.mxu0 0.0
        %823 = vmatpush1.xpose.msra.mxu0 0.0
        %824 = vmatprep.mubr.f32.mxu0 0.0
        %825 = vmatmul.mubr.f32.gmra.mrb[0].mxu0 %v756
        %v826 = vpop.f32.mrb[0].mxu0
        %v827 = vadd.f32 0.0, %v826
        %v828 = vpop.f32.mrb[0].mxu0
        %829 = vdwg.mxu0
        %v830 = vsel %vm275, %v827, -inf
        %831 = vmax.xlane.f32.xlu0 %v830
        %v832 = vpop.xlane.xlu0 %831
        %v833 = vsub.f32 %v827, %v832
        %v834 = vmul.f32 %v833, 1.442695
        %v835 = vpow.pop %v834
        %v836 = vsel %vm275, %v835, 0.0
        %837 = vadd.xlane.f32.xlu0 %v836
        %v838 = vpop.xlane.xlu0 %837
        %v839 = vrcp.pop %v838
        %v840 = vmul.f32 %v835, %v839
        %841 = vrot.lane.b32.xlu0 %v263, 48
        %v842 = vpop.permute.xlu0 %841
        %v845 = vsel %vm275, %v840, 0
        %847 = vmatprep.subr.mxu0 0.0
        %848 = vmatpush1.msra.mxu0 %v842
        %849 = vmatprep.subr.mxu0 0.0
        %850 = vmatpush1.msra.mxu0 0.0
        %851 = vmatprep.subr.mxu0 0.0
        %852 = vmatpush1.msra.mxu0 0.0
        %853 = vmatprep.subr.mxu0 0.0
        %854 = vmatpush1.msra.mxu0 0.0
        %855 = vmatprep.subr.mxu0 0.0
        %856 = vmatpush1.msra.mxu0 0.0
        %857 = vmatprep.subr.mxu0 0.0
        %858 = vmatpush1.msra.mxu0 0.0
        %859 = vmatprep.subr.mxu0 0.0
        %860 = vmatpush1.msra.mxu0 0.0
        %861 = vmatprep.subr.mxu0 0.0
        %862 = vmatpush1.msra.mxu0 0.0
        %863 = vmatprep.subr.mxu0 0.0
        %864 = vmatpush1.msra.mxu0 0.0
        %865 = vmatprep.subr.mxu0 0.0
        %866 = vmatpush1.msra.mxu0 0.0
        %867 = vmatprep.subr.mxu0 0.0
        %868 = vmatpush1.msra.mxu0 0.0
        %869 = vmatprep.subr.mxu0 0.0
        %870 = vmatpush1.msra.mxu0 0.0
        %871 = vmatprep.subr.mxu0 0.0
        %872 = vmatpush1.msra.mxu0 0.0
        %873 = vmatprep.subr.mxu0 0.0
        %874 = vmatpush1.msra.mxu0 0.0
        %875 = vmatprep.subr.mxu0 0.0
        %876 = vmatpush1.msra.mxu0 0.0
        %877 = vmatprep.subr.mxu0 0.0
        %878 = vmatpush1.msra.mxu0 0.0
        %879 = vmatprep.subr.mxu0 0.0
        %880 = vmatpush1.msra.mxu0 0.0
        %881 = vmatprep.subr.mxu0 0.0
        %882 = vmatpush1.msra.mxu0 0.0
        %883 = vmatprep.subr.mxu0 0.0
        %884 = vmatpush1.msra.mxu0 0.0
        %885 = vmatprep.subr.mxu0 0.0
        %886 = vmatpush1.msra.mxu0 0.0
        %887 = vmatprep.subr.mxu0 0.0
        %888 = vmatpush1.msra.mxu0 0.0
        %889 = vmatprep.subr.mxu0 0.0
        %890 = vmatpush1.msra.mxu0 0.0
        %891 = vmatprep.subr.mxu0 0.0
        %892 = vmatpush1.msra.mxu0 0.0
        %893 = vmatprep.subr.mxu0 0.0
        %894 = vmatpush1.msra.mxu0 0.0
        %895 = vmatprep.subr.mxu0 0.0
        %896 = vmatpush1.msra.mxu0 0.0
        %897 = vmatprep.subr.mxu0 0.0
        %898 = vmatpush1.msra.mxu0 0.0
        %899 = vmatprep.subr.mxu0 0.0
        %900 = vmatpush1.msra.mxu0 0.0
        %901 = vmatprep.subr.mxu0 0.0
        %902 = vmatpush1.msra.mxu0 0.0
        %903 = vmatprep.subr.mxu0 0.0
        %904 = vmatpush1.msra.mxu0 0.0
        %905 = vmatprep.subr.mxu0 0.0
        %906 = vmatpush1.msra.mxu0 0.0
        %907 = vmatprep.subr.mxu0 0.0
        %908 = vmatpush1.msra.mxu0 0.0
        %909 = vmatprep.subr.mxu0 0.0
        %910 = vmatpush1.msra.mxu0 0.0
        %911 = vmatprep.mubr.f32.mxu0 0.0
        %912 = vmatmul.mubr.f32.gmra.mrb[0].mxu0 %v845
        %v913 = vpop.f32.mrb[0].mxu0
        %v914 = vadd.f32 0.0, %v913
        %v915 = vpop.f32.mrb[0].mxu0
        %916 = vdwg.mxu0
        %v917 = vld [vmem:[#allocation5 + $0x98] sm:$0xff]
        %v919 = vsel %vm275, %v914, 0
        %921 = vmatprep.subr.mxu0 0.0
        %922 = vmatpush1.msra.mxu0 %v917
        %923 = vmatprep.subr.mxu0 0.0
        %924 = vmatpush1.msra.mxu0 0.0
        %925 = vmatprep.subr.mxu0 0.0
        %926 = vmatpush1.msra.mxu0 0.0
        %927 = vmatprep.subr.mxu0 0.0
        %928 = vmatpush1.msra.mxu0 0.0
        %929 = vmatprep.subr.mxu0 0.0
        %930 = vmatpush1.msra.mxu0 0.0
        %931 = vmatprep.subr.mxu0 0.0
        %932 = vmatpush1.msra.mxu0 0.0
        %933 = vmatprep.subr.mxu0 0.0
        %934 = vmatpush1.msra.mxu0 0.0
        %935 = vmatprep.subr.mxu0 0.0
        %936 = vmatpush1.msra.mxu0 0.0
        %937 = vmatprep.subr.mxu0 0.0
        %938 = vmatpush1.msra.mxu0 0.0
        %939 = vmatprep.subr.mxu0 0.0
        %940 = vmatpush1.msra.mxu0 0.0
        %941 = vmatprep.subr.mxu0 0.0
        %942 = vmatpush1.msra.mxu0 0.0
        %943 = vmatprep.subr.mxu0 0.0
        %944 = vmatpush1.msra.mxu0 0.0
        %945 = vmatprep.subr.mxu0 0.0
        %946 = vmatpush1.msra.mxu0 0.0
        %947 = vmatprep.subr.mxu0 0.0
        %948 = vmatpush1.msra.mxu0 0.0
        %949 = vmatprep.subr.mxu0 0.0
        %950 = vmatpush1.msra.mxu0 0.0
        %951 = vmatprep.subr.mxu0 0.0
        %952 = vmatpush1.msra.mxu0 0.0
        %953 = vmatprep.subr.mxu0 0.0
        %954 = vmatpush1.msra.mxu0 0.0
        %955 = vmatprep.subr.mxu0 0.0
        %956 = vmatpush1.msra.mxu0 0.0
        %957 = vmatprep.subr.mxu0 0.0
        %958 = vmatpush1.msra.mxu0 0.0
        %959 = vmatprep.subr.mxu0 0.0
        %960 = vmatpush1.msra.mxu0 0.0
        %961 = vmatprep.subr.mxu0 0.0
        %962 = vmatpush1.msra.mxu0 0.0
        %963 = vmatprep.subr.mxu0 0.0
        %964 = vmatpush1.msra.mxu0 0.0
        %965 = vmatprep.subr.mxu0 0.0
        %966 = vmatpush1.msra.mxu0 0.0
        %967 = vmatprep.subr.mxu0 0.0
        %968 = vmatpush1.msra.mxu0 0.0
        %969 = vmatprep.subr.mxu0 0.0
        %970 = vmatpush1.msra.mxu0 0.0
        %971 = vmatprep.subr.mxu0 0.0
        %972 = vmatpush1.msra.mxu0 0.0
        %973 = vmatprep.subr.mxu0 0.0
        %974 = vmatpush1.msra.mxu0 0.0
        %975 = vmatprep.subr.mxu0 0.0
        %976 = vmatpush1.msra.mxu0 0.0
        %977 = vmatprep.subr.mxu0 0.0
        %978 = vmatpush1.msra.mxu0 0.0
        %979 = vmatprep.subr.mxu0 0.0
        %980 = vmatpush1.msra.mxu0 0.0
        %981 = vmatprep.subr.mxu0 0.0
        %982 = vmatpush1.msra.mxu0 0.0
        %983 = vmatprep.subr.mxu0 0.0
        %984 = vmatpush1.msra.mxu0 0.0
        %985 = vmatprep.mubr.f32.mxu0 0.0
        %986 = vmatmul.mubr.f32.gmra.mrb[0].mxu0 %v919
        %v987 = vpop.f32.mrb[0].mxu0
        %v988 = vadd.f32 0.0, %v987
        %v989 = vpop.f32.mrb[0].mxu0
        %990 = vdwg.mxu0
        %v991 = vadd.f32 %v751, %v988
        %992 = vrot.lane.b32.xlu0 %v263, 104
        %v993 = vpop.permute.xlu0 %992
        %994 = vrot.lane.b32.xlu0 %v263, 72
        %v995 = vpop.permute.xlu0 %994
        %v996 = vsel %vm275, %v993, 0
        %v998 = vsel %vm275, %v995, 0
        %1000 = vmatprep.subr.mxu0 0.0
        %1001 = vmatpush1.xpose.msra.mxu0 %v998
        %1002 = vmatprep.subr.mxu0 0.0
        %1003 = vmatpush1.xpose.msra.mxu0 0.0
        %1004 = vmatprep.subr.mxu0 0.0
        %1005 = vmatpush1.xpose.msra.mxu0 0.0
        %1006 = vmatprep.subr.mxu0 0.0
        %1007 = vmatpush1.xpose.msra.mxu0 0.0
        %1008 = vmatprep.subr.mxu0 0.0
        %1009 = vmatpush1.xpose.msra.mxu0 0.0
        %1010 = vmatprep.subr.mxu0 0.0
        %1011 = vmatpush1.xpose.msra.mxu0 0.0
        %1012 = vmatprep.subr.mxu0 0.0
        %1013 = vmatpush1.xpose.msra.mxu0 0.0
        %1014 = vmatprep.subr.mxu0 0.0
        %1015 = vmatpush1.xpose.msra.mxu0 0.0
        %1016 = vmatprep.subr.mxu0 0.0
        %1017 = vmatpush1.xpose.msra.mxu0 0.0
        %1018 = vmatprep.subr.mxu0 0.0
        %1019 = vmatpush1.xpose.msra.mxu0 0.0
        %1020 = vmatprep.subr.mxu0 0.0
        %1021 = vmatpush1.xpose.msra.mxu0 0.0
        %1022 = vmatprep.subr.mxu0 0.0
        %1023 = vmatpush1.xpose.msra.mxu0 0.0
        %1024 = vmatprep.subr.mxu0 0.0
        %1025 = vmatpush1.xpose.msra.mxu0 0.0
        %1026 = vmatprep.subr.mxu0 0.0
        %1027 = vmatpush1.xpose.msra.mxu0 0.0
        %1028 = vmatprep.subr.mxu0 0.0
        %1029 = vmatpush1.xpose.msra.mxu0 0.0
        %1030 = vmatprep.subr.mxu0 0.0
        %1031 = vmatpush1.xpose.msra.mxu0 0.0
        %1032 = vmatprep.subr.mxu0 0.0
        %1033 = vmatpush1.xpose.msra.mxu0 0.0
        %1034 = vmatprep.subr.mxu0 0.0
        %1035 = vmatpush1.xpose.msra.mxu0 0.0
        %1036 = vmatprep.subr.mxu0 0.0
        %1037 = vmatpush1.xpose.msra.mxu0 0.0
        %1038 = vmatprep.subr.mxu0 0.0
        %1039 = vmatpush1.xpose.msra.mxu0 0.0
        %1040 = vmatprep.subr.mxu0 0.0
        %1041 = vmatpush1.xpose.msra.mxu0 0.0
        %1042 = vmatprep.subr.mxu0 0.0
        %1043 = vmatpush1.xpose.msra.mxu0 0.0
        %1044 = vmatprep.subr.mxu0 0.0
        %1045 = vmatpush1.xpose.msra.mxu0 0.0
        %1046 = vmatprep.subr.mxu0 0.0
        %1047 = vmatpush1.xpose.msra.mxu0 0.0
        %1048 = vmatprep.subr.mxu0 0.0
        %1049 = vmatpush1.xpose.msra.mxu0 0.0
        %1050 = vmatprep.subr.mxu0 0.0
        %1051 = vmatpush1.xpose.msra.mxu0 0.0
        %1052 = vmatprep.subr.mxu0 0.0
        %1053 = vmatpush1.xpose.msra.mxu0 0.0
        %1054 = vmatprep.subr.mxu0 0.0
        %1055 = vmatpush1.xpose.msra.mxu0 0.0
        %1056 = vmatprep.subr.mxu0 0.0
        %1057 = vmatpush1.xpose.msra.mxu0 0.0
        %1058 = vmatprep.subr.mxu0 0.0
        %1059 = vmatpush1.xpose.msra.mxu0 0.0
        %1060 = vmatprep.subr.mxu0 0.0
        %1061 = vmatpush1.xpose.msra.mxu0 0.0
        %1062 = vmatprep.subr.mxu0 0.0
        %1063 = vmatpush1.xpose.msra.mxu0 0.0
        %1064 = vmatprep.mubr.f32.mxu0 0.0
        %1065 = vmatmul.mubr.f32.gmra.mrb[0].mxu0 %v996
        %v1066 = vpop.f32.mrb[0].mxu0
        %v1067 = vadd.f32 0.0, %v1066
        %v1068 = vpop.f32.mrb[0].mxu0
        %1069 = vdwg.mxu0
        %v1070 = vsel %vm275, %v1067, -inf
        %1071 = vmax.xlane.f32.xlu0 %v1070
        %v1072 = vpop.xlane.xlu0 %1071
        %v1073 = vsub.f32 %v1067, %v1072
        %v1074 = vmul.f32 %v1073, 1.442695
        %v1075 = vpow.pop %v1074
        %v1076 = vsel %vm275, %v1075, 0.0
        %1077 = vadd.xlane.f32.xlu0 %v1076
        %v1078 = vpop.xlane.xlu0 %1077
        %v1079 = vrcp.pop %v1078
        %v1080 = vmul.f32 %v1075, %v1079
        %1081 = vrot.lane.b32.xlu0 %v263, 40
        %v1082 = vpop.permute.xlu0 %1081
        %v1085 = vsel %vm275, %v1080, 0
        %1087 = vmatprep.subr.mxu0 0.0
        %1088 = vmatpush1.msra.mxu0 %v1082
        %1089 = vmatprep.subr.mxu0 0.0
        %1090 = vmatpush1.msra.mxu0 0.0
        %1091 = vmatprep.subr.mxu0 0.0
        %1092 = vmatpush1.msra.mxu0 0.0
        %1093 = vmatprep.subr.mxu0 0.0
        %1094 = vmatpush1.msra.mxu0 0.0
        %1095 = vmatprep.subr.mxu0 0.0
        %1096 = vmatpush1.msra.mxu0 0.0
        %1097 = vmatprep.subr.mxu0 0.0
        %1098 = vmatpush1.msra.mxu0 0.0
        %1099 = vmatprep.subr.mxu0 0.0
        %1100 = vmatpush1.msra.mxu0 0.0
        %1101 = vmatprep.subr.mxu0 0.0
        %1102 = vmatpush1.msra.mxu0 0.0
        %1103 = vmatprep.subr.mxu0 0.0
        %1104 = vmatpush1.msra.mxu0 0.0
        %1105 = vmatprep.subr.mxu0 0.0
        %1106 = vmatpush1.msra.mxu0 0.0
        %1107 = vmatprep.subr.mxu0 0.0
        %1108 = vmatpush1.msra.mxu0 0.0
        %1109 = vmatprep.subr.mxu0 0.0
        %1110 = vmatpush1.msra.mxu0 0.0
        %1111 = vmatprep.subr.mxu0 0.0
        %1112 = vmatpush1.msra.mxu0 0.0
        %1113 = vmatprep.subr.mxu0 0.0
        %1114 = vmatpush1.msra.mxu0 0.0
        %1115 = vmatprep.subr.mxu0 0.0
        %1116 = vmatpush1.msra.mxu0 0.0
        %1117 = vmatprep.subr.mxu0 0.0
        %1118 = vmatpush1.msra.mxu0 0.0
        %1119 = vmatprep.subr.mxu0 0.0
        %1120 = vmatpush1.msra.mxu0 0.0
        %1121 = vmatprep.subr.mxu0 0.0
        %1122 = vmatpush1.msra.mxu0 0.0
        %1123 = vmatprep.subr.mxu0 0.0
        %1124 = vmatpush1.msra.mxu0 0.0
        %1125 = vmatprep.subr.mxu0 0.0
        %1126 = vmatpush1.msra.mxu0 0.0
        %1127 = vmatprep.subr.mxu0 0.0
        %1128 = vmatpush1.msra.mxu0 0.0
        %1129 = vmatprep.subr.mxu0 0.0
        %1130 = vmatpush1.msra.mxu0 0.0
        %1131 = vmatprep.subr.mxu0 0.0
        %1132 = vmatpush1.msra.mxu0 0.0
        %1133 = vmatprep.subr.mxu0 0.0
        %1134 = vmatpush1.msra.mxu0 0.0
        %1135 = vmatprep.subr.mxu0 0.0
        %1136 = vmatpush1.msra.mxu0 0.0
        %1137 = vmatprep.subr.mxu0 0.0
        %1138 = vmatpush1.msra.mxu0 0.0
        %1139 = vmatprep.subr.mxu0 0.0
        %1140 = vmatpush1.msra.mxu0 0.0
        %1141 = vmatprep.subr.mxu0 0.0
        %1142 = vmatpush1.msra.mxu0 0.0
        %1143 = vmatprep.subr.mxu0 0.0
        %1144 = vmatpush1.msra.mxu0 0.0
        %1145 = vmatprep.subr.mxu0 0.0
        %1146 = vmatpush1.msra.mxu0 0.0
        %1147 = vmatprep.subr.mxu0 0.0
        %1148 = vmatpush1.msra.mxu0 0.0
        %1149 = vmatprep.subr.mxu0 0.0
        %1150 = vmatpush1.msra.mxu0 0.0
        %1151 = vmatprep.mubr.f32.mxu0 0.0
        %1152 = vmatmul.mubr.f32.gmra.mrb[0].mxu0 %v1085
        %v1153 = vpop.f32.mrb[0].mxu0
        %v1154 = vadd.f32 0.0, %v1153
        %v1155 = vpop.f32.mrb[0].mxu0
        %1156 = vdwg.mxu0
        %v1157 = vld [vmem:[#allocation5 + $0xa0] sm:$0xff]
        %v1159 = vsel %vm275, %v1154, 0
        %1161 = vmatprep.subr.mxu0 0.0
        %1162 = vmatpush1.msra.mxu0 %v1157
        %1163 = vmatprep.subr.mxu0 0.0
        %1164 = vmatpush1.msra.mxu0 0.0
        %1165 = vmatprep.subr.mxu0 0.0
        %1166 = vmatpush1.msra.mxu0 0.0
        %1167 = vmatprep.subr.mxu0 0.0
        %1168 = vmatpush1.msra.mxu0 0.0
        %1169 = vmatprep.subr.mxu0 0.0
        %1170 = vmatpush1.msra.mxu0 0.0
        %1171 = vmatprep.subr.mxu0 0.0
        %1172 = vmatpush1.msra.mxu0 0.0
        %1173 = vmatprep.subr.mxu0 0.0
        %1174 = vmatpush1.msra.mxu0 0.0
        %1175 = vmatprep.subr.mxu0 0.0
        %1176 = vmatpush1.msra.mxu0 0.0
        %1177 = vmatprep.subr.mxu0 0.0
        %1178 = vmatpush1.msra.mxu0 0.0
        %1179 = vmatprep.subr.mxu0 0.0
        %1180 = vmatpush1.msra.mxu0 0.0
        %1181 = vmatprep.subr.mxu0 0.0
        %1182 = vmatpush1.msra.mxu0 0.0
        %1183 = vmatprep.subr.mxu0 0.0
        %1184 = vmatpush1.msra.mxu0 0.0
        %1185 = vmatprep.subr.mxu0 0.0
        %1186 = vmatpush1.msra.mxu0 0.0
        %1187 = vmatprep.subr.mxu0 0.0
        %1188 = vmatpush1.msra.mxu0 0.0
        %1189 = vmatprep.subr.mxu0 0.0
        %1190 = vmatpush1.msra.mxu0 0.0
        %1191 = vmatprep.subr.mxu0 0.0
        %1192 = vmatpush1.msra.mxu0 0.0
        %1193 = vmatprep.subr.mxu0 0.0
        %1194 = vmatpush1.msra.mxu0 0.0
        %1195 = vmatprep.subr.mxu0 0.0
        %1196 = vmatpush1.msra.mxu0 0.0
        %1197 = vmatprep.subr.mxu0 0.0
        %1198 = vmatpush1.msra.mxu0 0.0
        %1199 = vmatprep.subr.mxu0 0.0
        %1200 = vmatpush1.msra.mxu0 0.0
        %1201 = vmatprep.subr.mxu0 0.0
        %1202 = vmatpush1.msra.mxu0 0.0
        %1203 = vmatprep.subr.mxu0 0.0
        %1204 = vmatpush1.msra.mxu0 0.0
        %1205 = vmatprep.subr.mxu0 0.0
        %1206 = vmatpush1.msra.mxu0 0.0
        %1207 = vmatprep.subr.mxu0 0.0
        %1208 = vmatpush1.msra.mxu0 0.0
        %1209 = vmatprep.subr.mxu0 0.0
        %1210 = vmatpush1.msra.mxu0 0.0
        %1211 = vmatprep.subr.mxu0 0.0
        %1212 = vmatpush1.msra.mxu0 0.0
        %1213 = vmatprep.subr.mxu0 0.0
        %1214 = vmatpush1.msra.mxu0 0.0
        %1215 = vmatprep.subr.mxu0 0.0
        %1216 = vmatpush1.msra.mxu0 0.0
        %1217 = vmatprep.subr.mxu0 0.0
        %1218 = vmatpush1.msra.mxu0 0.0
        %1219 = vmatprep.subr.mxu0 0.0
        %1220 = vmatpush1.msra.mxu0 0.0
        %1221 = vmatprep.subr.mxu0 0.0
        %1222 = vmatpush1.msra.mxu0 0.0
        %1223 = vmatprep.subr.mxu0 0.0
        %1224 = vmatpush1.msra.mxu0 0.0
        %1225 = vmatprep.mubr.f32.mxu0 0.0
        %1226 = vmatmul.mubr.f32.gmra.mrb[0].mxu0 %v1159
        %v1227 = vpop.f32.mrb[0].mxu0
        %v1228 = vadd.f32 0.0, %v1227
        %v1229 = vpop.f32.mrb[0].mxu0
        %1230 = vdwg.mxu0
        %v1231 = vadd.f32 %v991, %v1228
        %v1232 = vld [vmem:[#allocation5 + $0xb0] sm:$0xff]
        %v1233 = vld [vmem:[#allocation5 + $0xb8] sm:$0xff]
        %v1234 = vld [vmem:[#allocation5 + $0xc0] sm:$0xff]
        %v1235 = vld [vmem:[#allocation5 + $0xc8] sm:$0xff]
        %v1236 = vld [vmem:[#allocation5 + $0xd0] sm:$0xff]
        %v1237 = vld [vmem:[#allocation5 + $0xd8] sm:$0xff]
        %v1238 = vld [vmem:[#allocation5 + $0xe0] sm:$0xff]
        %v1239 = vld [vmem:[#allocation5 + $0xe8] sm:$0xff]
        %v1240 = vld [vmem:[#allocation5 + $0xf0] sm:$0xff]
        %v1241 = vld [vmem:[#allocation5 + $0xf8] sm:$0xff]
        %v1242 = vld [vmem:[#allocation5 + $0x100] sm:$0xff]
        %v1243 = vld [vmem:[#allocation5 + $0x108] sm:$0xff]
        %v1244 = vld [vmem:[#allocation5 + $0x110] sm:$0xff]
        %v1245 = vld [vmem:[#allocation5 + $0x118] sm:$0xff]
        %v1246 = vld [vmem:[#allocation5 + $0x120] sm:$0xff]
        %v1247 = vld [vmem:[#allocation5 + $0x128] sm:$0xff]
        %v1248 = vld [vmem:[#allocation5 + $0x130] sm:$0x1]
        %v1249 = vlaneseq
        %v1250 = vshrl.u32 %v1249, 7
        %v1251 = vsub.s32 0, %v1250
        %v1252 = vrot.slane %v1248, %v1251
        %1253 = vmatprep.subr.mxu0 0.0
        %1254 = vmatpush1.msra.mxu0 %v1232
        %1255 = vmatprep.subr.mxu0 0.0
        %1256 = vmatpush1.msra.mxu0 %v1233
        %1257 = vmatprep.subr.mxu0 0.0
        %1258 = vmatpush1.msra.mxu0 %v1234
        %1259 = vmatprep.subr.mxu0 0.0
        %1260 = vmatpush1.msra.mxu0 %v1235
        %1261 = vmatprep.subr.mxu0 0.0
        %1262 = vmatpush1.msra.mxu0 %v1236
        %1263 = vmatprep.subr.mxu0 0.0
        %1264 = vmatpush1.msra.mxu0 %v1237
        %1265 = vmatprep.subr.mxu0 0.0
        %1266 = vmatpush1.msra.mxu0 %v1238
        %1267 = vmatprep.subr.mxu0 0.0
        %1268 = vmatpush1.msra.mxu0 %v1239
        %1269 = vmatprep.subr.mxu0 0.0
        %1270 = vmatpush1.msra.mxu0 %v1240
        %1271 = vmatprep.subr.mxu0 0.0
        %1272 = vmatpush1.msra.mxu0 %v1241
        %1273 = vmatprep.subr.mxu0 0.0
        %1274 = vmatpush1.msra.mxu0 %v1242
        %1275 = vmatprep.subr.mxu0 0.0
        %1276 = vmatpush1.msra.mxu0 %v1243
        %1277 = vmatprep.subr.mxu0 0.0
        %1278 = vmatpush1.msra.mxu0 %v1244
        %1279 = vmatprep.subr.mxu0 0.0
        %1280 = vmatpush1.msra.mxu0 %v1245
        %1281 = vmatprep.subr.mxu0 0.0
        %1282 = vmatpush1.msra.mxu0 %v1246
        %1283 = vmatprep.subr.mxu0 0.0
        %1284 = vmatpush1.msra.mxu0 %v1247
        %1285 = vmatprep.subr.mxu0 0.0
        %1286 = vmatpush1.msra.mxu0 0.0
        %1287 = vmatprep.subr.mxu0 0.0
        %1288 = vmatpush1.msra.mxu0 0.0
        %1289 = vmatprep.subr.mxu0 0.0
        %1290 = vmatpush1.msra.mxu0 0.0
        %1291 = vmatprep.subr.mxu0 0.0
        %1292 = vmatpush1.msra.mxu0 0.0
        %1293 = vmatprep.subr.mxu0 0.0
        %1294 = vmatpush1.msra.mxu0 0.0
        %1295 = vmatprep.subr.mxu0 0.0
        %1296 = vmatpush1.msra.mxu0 0.0
        %1297 = vmatprep.subr.mxu0 0.0
        %1298 = vmatpush1.msra.mxu0 0.0
        %1299 = vmatprep.subr.mxu0 0.0
        %1300 = vmatpush1.msra.mxu0 0.0
        %1301 = vmatprep.subr.mxu0 0.0
        %1302 = vmatpush1.msra.mxu0 0.0
        %1303 = vmatprep.subr.mxu0 0.0
        %1304 = vmatpush1.msra.mxu0 0.0
        %1305 = vmatprep.subr.mxu0 0.0
        %1306 = vmatpush1.msra.mxu0 0.0
        %1307 = vmatprep.subr.mxu0 0.0
        %1308 = vmatpush1.msra.mxu0 0.0
        %1309 = vmatprep.subr.mxu0 0.0
        %1310 = vmatpush1.msra.mxu0 0.0
        %1311 = vmatprep.subr.mxu0 0.0
        %1312 = vmatpush1.msra.mxu0 0.0
        %1313 = vmatprep.subr.mxu0 0.0
        %1314 = vmatpush1.msra.mxu0 0.0
        %1315 = vmatprep.subr.mxu0 0.0
        %1316 = vmatpush1.msra.mxu0 0.0
        %1317 = vmatprep.mubr.f32.mxu0 0.0
        %1318 = vmatmul.mubr.f32.gmra.mrb[0].mxu0 %v1231
        %v1319 = vpop.f32.mrb[0].mxu0
        %v1320 = vadd.f32 %v1252, %v1319
        %v1321 = vpop.f32.mrb[0].mxu0
        %1322 = vdwg.mxu0
        %v1323 = vmax.f32 %v1320, 0.0
        %v1324 = vld [vmem:[#allocation5 + $0x138] sm:$0xff]
        %v1325 = vld [vmem:[#allocation5 + $0x140] sm:$0xff]
        %v1326 = vld [vmem:[#allocation5 + $0x148] sm:$0xff]
        %v1327 = vld [vmem:[#allocation5 + $0x150] sm:$0xff]
        %v1328 = vld [vmem:[#allocation5 + $0x158] sm:$0xff]
        %v1329 = vld [vmem:[#allocation5 + $0x160] sm:$0xff]
        %v1330 = vld [vmem:[#allocation5 + $0x168] sm:$0xff]
        %v1331 = vld [vmem:[#allocation5 + $0x170] sm:$0xff]
        %v1332 = vld [vmem:[#allocation5 + $0x178] sm:$0xff]
        %v1333 = vld [vmem:[#allocation5 + $0x180] sm:$0xff]
        %v1334 = vld [vmem:[#allocation5 + $0x188] sm:$0xff]
        %v1335 = vld [vmem:[#allocation5 + $0x190] sm:$0xff]
        %v1336 = vld [vmem:[#allocation5 + $0x198] sm:$0xff]
        %v1337 = vld [vmem:[#allocation5 + $0x1a0] sm:$0xff]
        %v1338 = vld [vmem:[#allocation5 + $0x1a8] sm:$0xff]
        %v1339 = vld [vmem:[#allocation5 + $0x1b0] sm:$0xff]
        %v1340 = vld [vmem:[#allocation5 + $0x1b8] sm:$0x1]
        %v1341 = vlaneseq
        %v1342 = vshrl.u32 %v1341, 7
        %v1343 = vsub.s32 0, %v1342
        %v1344 = vrot.slane %v1340, %v1343
        %1345 = vmatprep.subr.mxu0 0.0
        %1346 = vmatpush1.msra.mxu0 %v1324
        %1347 = vmatprep.subr.mxu0 0.0
        %1348 = vmatpush1.msra.mxu0 %v1325
        %1349 = vmatprep.subr.mxu0 0.0
        %1350 = vmatpush1.msra.mxu0 %v1326
        %1351 = vmatprep.subr.mxu0 0.0
        %1352 = vmatpush1.msra.mxu0 %v1327
        %1353 = vmatprep.subr.mxu0 0.0
        %1354 = vmatpush1.msra.mxu0 %v1328
        %1355 = vmatprep.subr.mxu0 0.0
        %1356 = vmatpush1.msra.mxu0 %v1329
        %1357 = vmatprep.subr.mxu0 0.0
        %1358 = vmatpush1.msra.mxu0 %v1330
        %1359 = vmatprep.subr.mxu0 0.0
        %1360 = vmatpush1.msra.mxu0 %v1331
        %1361 = vmatprep.subr.mxu0 0.0
        %1362 = vmatpush1.msra.mxu0 %v1332
        %1363 = vmatprep.subr.mxu0 0.0
        %1364 = vmatpush1.msra.mxu0 %v1333
        %1365 = vmatprep.subr.mxu0 0.0
        %1366 = vmatpush1.msra.mxu0 %v1334
        %1367 = vmatprep.subr.mxu0 0.0
        %1368 = vmatpush1.msra.mxu0 %v1335
        %1369 = vmatprep.subr.mxu0 0.0
        %1370 = vmatpush1.msra.mxu0 %v1336
        %1371 = vmatprep.subr.mxu0 0.0
        %1372 = vmatpush1.msra.mxu0 %v1337
        %1373 = vmatprep.subr.mxu0 0.0
        %1374 = vmatpush1.msra.mxu0 %v1338
        %1375 = vmatprep.subr.mxu0 0.0
        %1376 = vmatpush1.msra.mxu0 %v1339
        %1377 = vmatprep.subr.mxu0 0.0
        %1378 = vmatpush1.msra.mxu0 0.0
        %1379 = vmatprep.subr.mxu0 0.0
        %1380 = vmatpush1.msra.mxu0 0.0
        %1381 = vmatprep.subr.mxu0 0.0
        %1382 = vmatpush1.msra.mxu0 0.0
        %1383 = vmatprep.subr.mxu0 0.0
        %1384 = vmatpush1.msra.mxu0 0.0
        %1385 = vmatprep.subr.mxu0 0.0
        %1386 = vmatpush1.msra.mxu0 0.0
        %1387 = vmatprep.subr.mxu0 0.0
        %1388 = vmatpush1.msra.mxu0 0.0
        %1389 = vmatprep.subr.mxu0 0.0
        %1390 = vmatpush1.msra.mxu0 0.0
        %1391 = vmatprep.subr.mxu0 0.0
        %1392 = vmatpush1.msra.mxu0 0.0
        %1393 = vmatprep.subr.mxu0 0.0
        %1394 = vmatpush1.msra.mxu0 0.0
        %1395 = vmatprep.subr.mxu0 0.0
        %1396 = vmatpush1.msra.mxu0 0.0
        %1397 = vmatprep.subr.mxu0 0.0
        %1398 = vmatpush1.msra.mxu0 0.0
        %1399 = vmatprep.subr.mxu0 0.0
        %1400 = vmatpush1.msra.mxu0 0.0
        %1401 = vmatprep.subr.mxu0 0.0
        %1402 = vmatpush1.msra.mxu0 0.0
        %1403 = vmatprep.subr.mxu0 0.0
        %1404 = vmatpush1.msra.mxu0 0.0
        %1405 = vmatprep.subr.mxu0 0.0
        %1406 = vmatpush1.msra.mxu0 0.0
        %1407 = vmatprep.subr.mxu0 0.0
        %1408 = vmatpush1.msra.mxu0 0.0
        %1409 = vmatprep.mubr.f32.mxu0 0.0
        %1410 = vmatmul.mubr.f32.gmra.mrb[0].mxu0 %v1323
        %v1411 = vpop.f32.mrb[0].mxu0
        %v1412 = vadd.f32 %v1344, %v1411
        %v1413 = vpop.f32.mrb[0].mxu0
        %1414 = vdwg.mxu0
        %v1415 = vadd.f32 %v1231, %v1412
        %1416 = vst [vmem:[%s173] sm:$0xff] %v1415
        %s1417 = sand.u32 %s75, 1
        %s1418 = scalar_lea.sflag [#allocation4], %s1417
        %s1419 = sand.u32 %s75, 1
        %s1420 = smul.addr %s1419, 8
        %s1421 = scalar_lea.vmem [#allocation7], %s1420
        // Predicated region
        $region37: #{tpu_custom_call.1} parent=27 // pred_check
          %p1422 = pneg %p85
        $region38: #{tpu_custom_call.1} parent=27 // pred_check_branch
          %1424 = sbr.rel (%p1422) target = $region40
        $region39: #{tpu_custom_call.1} parent=27 // pred_region
          %s1426 = ssub.s32 128, 128
          %1427 = vsyncadd %s1418, %s1426
          %s1428 = smul.addr %s20, 128
          %s1429 = scalar_lea.hbm %s2, %s1428
          %s1431 = sshll.u32 %s1421, 4
          %s1432 = int_to_ptr.vmem [resolvable:$true] %s1431
          %1434 = dma.vmem_to_hbm [thread:$0]  %s1432, 128, %s1429, %s1418
        $region40: #{tpu_custom_call.1} parent=27 // pred_fallthru
          _
      $region28: #{tpu_custom_call.1} parent=5 // pred_fallthru
        _
      %p1435 = scmp.le.s32.totalorder 2, %s15
      // Predicated region
      $region41: #{tpu_custom_call.1} parent=5 // pred_check
        %p1436 = pneg %p1435
      $region42: #{tpu_custom_call.1} parent=5 // pred_check_branch
        %1438 = sbr.rel (%p1436) target = $region44
      $region43: #{tpu_custom_call.1} parent=5 // pred_region
        %s1439 = ssub.s32 %s15, 2
        // Predicated region
        $region45: #{tpu_custom_call.1} parent=43 // pred_check
          %p1440 = pneg %p91
        $region46: #{tpu_custom_call.1} parent=43 // pred_check_branch
          %1442 = sbr.rel (%p1440) target = $region48
        $region47: #{tpu_custom_call.1} parent=43 // pred_region
          %s1443 = sand.u32 %s76, 1
          %s1444 = scalar_lea.sflag [#allocation4], %s1443
          %s1445 = sand.u32 %s76, 1
          %s1446 = smul.addr %s1445, 8
          %s1447 = scalar_lea.vmem [#allocation7], %s1446
          %1448 = dma.done %s1444, 128
        $region48: #{tpu_custom_call.1} parent=43 // pred_fallthru
          _
      $region44: #{tpu_custom_call.1} parent=5 // pred_fallthru
        _
    $region6: #{tpu_custom_call.1} parent=1 // loop_footer
      %s19 = sadd.s32 1, %s15
    $region7: #{tpu_custom_call.1} parent=1 // loop_footer_branch
      %14 = sbr.rel target = $region3
    $region8: #{tpu_custom_call.1} parent=1 // loop_exit
      _
    %1449 = vsyncpa [#allocation3], 1
    %s1450 = scalar_lea.sflag [#allocation3], 1
    %1451 = vsyncpa %s1450, 1
    %1452 = vsyncpa [#allocation6], 1
    %1453 = vsyncpa [#allocation4], 1
    %s1454 = scalar_lea.sflag [#allocation4], 1
    %1455 = vsyncpa %s1454, 1

</llo_original>
